<compile_context>
chip_gen: v7x
topology: tpu7x:2x2x1
jax: 0.10.0
libtpu: 0.0.40
codegen_flags: <defaults>
</compile_context>

<pallas_src>
import jax
import jax.numpy as jnp
from jax.experimental import pallas as pl
from jax.experimental.pallas import tpu as pltpu

DIM = 32          # embedding dim
DEPTH = 2         # number of layers
HEADS = 2
DIM_HEAD = 16
MLP_DIM = 64
INNER = HEADS * DIM_HEAD
EPS = 1e-5        # torch nn.LayerNorm default
SCALE = DIM_HEAD ** -0.5
MXU_DTYPE = jnp.bfloat16   # bf16 MXU operands, f32 accumulation

# Packed per-layer matmul slab (sublane rows x 128 lanes), zero padded:
#   rows [  0, 32) : fused projection  [ wq*scale | wk | wv@wo ]   (32 x 128)
#   rows [ 32, 64) : FF linear 1  w1                               (32 x  64)
#   rows [ 64,128) : FF linear 2  w2                               (64 x  32)
W_ROWS = 4 * DIM
# Packed bias/LayerNorm buffer: 8 rows per layer + 8 trailing rows (final norm).
V_STRIDE = 8


def _layernorm(x, g, b):
    mean = jnp.mean(x, axis=-1, keepdims=True)
    var = jnp.mean(jnp.square(x - mean), axis=-1, keepdims=True)
    return (x - mean) * jax.lax.rsqrt(var + EPS) * g + b


def _fused_kernel(x_ref, w_ref, v_ref, o_ref):
    B, N, D = x_ref.shape
    M = B * N
    x = x_ref[...].reshape(M, D)             # flatten batch block -> one matmul M

    def vrow(r, width):                      # (1, width) row slice, broadcasts over M
        return v_ref[r:r + 1, 0:width]

    # TODO(synk): if DEPTH grows beyond a few layers, switch this static unroll to
    # lax.fori_loop over w_ref[l] / v_ref rows to bound instruction count / vregs.
    for l in range(DEPTH):
        r = l * V_STRIDE
        ln1_g, ln1_b = vrow(r + 0, D), vrow(r + 1, D)
        b_o = vrow(r + 2, D)
        ln2_g, ln2_b = vrow(r + 3, D), vrow(r + 4, D)
        b1 = vrow(r + 5, MLP_DIM)
        b2 = vrow(r + 6, D)

        w_all = w_ref[l]                                   # (128, 128) bf16, one load
        wproj = w_all[0:DIM, :]                            # (32, 128)
        w1 = w_all[DIM:2 * DIM, 0:MLP_DIM]                 # (32, 64)
        w2 = w_all[2 * DIM:2 * DIM + MLP_DIM, 0:DIM]       # (64, 32)

        # ---- PreNorm + multi-head Attention ----
        h = _layernorm(x, ln1_g, ln1_b)
        # One lane-dense matmul produces all heads' Q, K and V@Wo at once.
        proj = jnp.dot(h.astype(MXU_DTYPE), wproj,
                       preferred_element_type=jnp.float32)           # (M, 128)

        attn = None
        for hh in range(HEADS):              # HEADS == 2: cheap static unroll
            q = proj[:, hh * DIM_HEAD:(hh + 1) * DIM_HEAD].reshape(B, N, DIM_HEAD)
            k = proj[:, INNER + hh * DIM_HEAD:
                        INNER + (hh + 1) * DIM_HEAD].reshape(B, N, DIM_HEAD)
            vo = proj[:, 2 * INNER + hh * D:
                         2 * INNER + (hh + 1) * D].reshape(B, N, D)
            # Batched over the batch axis (single leading batch dim) -> one
            # dot_general per head instead of one per (batch, head) pair.
            s = jnp.einsum("bqd,bkd->bqk",
                           q.astype(MXU_DTYPE), k.astype(MXU_DTYPE),
                           preferred_element_type=jnp.float32)        # (B, N, N)
            s = s - jnp.max(s, axis=-1, keepdims=True)
            p = jnp.exp(s)
            p = p * pl.reciprocal(jnp.sum(p, axis=-1, keepdims=True), approx=True)
            o = jnp.einsum("bqk,bkd->bqd",
                           p.astype(MXU_DTYPE), vo.astype(MXU_DTYPE),
                           preferred_element_type=jnp.float32)        # (B, N, D)
            attn = o if attn is None else attn + o
        x = x + attn.reshape(M, D) + b_o     # residual 1 (+ to_out bias)

        # ---- PreNorm + FeedForward ----
        h2 = _layernorm(x, ln2_g, ln2_b)
        h2 = jnp.dot(h2.astype(MXU_DTYPE), w1, preferred_element_type=jnp.float32) + b1
        h2 = jax.nn.gelu(h2, approximate=True)     # tanh form -> EUP slot
        h2 = jnp.dot(h2.astype(MXU_DTYPE), w2, preferred_element_type=jnp.float32) + b2
        x = x + h2                           # residual 2

    # ---- final LayerNorm ----
    fn_g = vrow(DEPTH * V_STRIDE + 0, D)
    fn_b = vrow(DEPTH * V_STRIDE + 1, D)
    out = _layernorm(x, fn_g, fn_b)
    o_ref[...] = out.reshape(B, N, D).astype(o_ref.dtype)


def transformer_forward(x, wbuf, vbuf):
    """Single fused, single-step pallas_call over the whole transformer."""
    B, N, D = x.shape

    def full_spec(a):
        zeros = (0,) * a.ndim
        return pl.BlockSpec(a.shape, lambda i, zeros=zeros: zeros)

    return pl.pallas_call(
        _fused_kernel,
        out_shape=jax.ShapeDtypeStruct((B, N, D), x.dtype),
        grid_spec=pltpu.PrefetchScalarGridSpec(
            num_scalar_prefetch=0,
            grid=(1,),                       # G=1: latency-bound at these shapes
            in_specs=[full_spec(x), full_spec(wbuf), full_spec(vbuf)],
            out_specs=full_spec(x),
        ),
        compiler_params=pltpu.CompilerParams(
            dimension_semantics=("arbitrary",)),
    )(x, wbuf, vbuf)


# ---------------------------------------------------------------------------
# Parameters: canonical (torch-layout) weights + one-time packing into the
# kernel layout (two contiguous buffers, Q scale + output proj folded in).
# ---------------------------------------------------------------------------
def init_params(key):
    def rnd(k, shape, scale=0.02):
        return scale * jax.random.normal(k, shape, jnp.float32)

    layers = []
    for d in range(DEPTH):
        k = jax.random.fold_in(key, d)
        ks = jax.random.split(k, 10)
        layers.append(dict(
            ln1_g=1.0 + rnd(ks[0], (DIM,), 0.1),
            ln1_b=rnd(ks[1], (DIM,), 0.1),
            w_qkv=rnd(ks[2], (DIM, 3 * INNER)),     # to_qkv (no bias), y = x @ W
            w_o=rnd(ks[3], (INNER, DIM)),           # to_out weight
            b_o=rnd(ks[4], (DIM,)),                 # to_out bias
            ln2_g=1.0 + rnd(ks[5], (DIM,), 0.1),
            ln2_b=rnd(ks[6], (DIM,), 0.1),
            w1=rnd(ks[7], (DIM, MLP_DIM)),
            b1=rnd(ks[8], (MLP_DIM,)),
            w2=rnd(ks[9], (MLP_DIM, DIM)),
            b2=jnp.zeros((DIM,), jnp.float32),
        ))
    kf = jax.random.fold_in(key, DEPTH)
    kg, kb = jax.random.split(kf)
    final = dict(g=1.0 + 0.1 * jax.random.normal(kg, (DIM,), jnp.float32),
                 b=0.1 * jax.random.normal(kb, (DIM,), jnp.float32))
    return layers, final


def pack_params(layers, final):
    """One-time (init-time) transform into the 2-buffer kernel layout."""
    L = len(layers)

    wslabs = []
    for lyr in layers:
        wqkv = lyr["w_qkv"]
        # torch rearrange 'b n (h d) -> b h n d' => columns are head-major.
        wq = wqkv[:, 0 * INNER:1 * INNER] * SCALE                  # fold softmax scale
        wk = wqkv[:, 1 * INNER:2 * INNER]
        wv = wqkv[:, 2 * INNER:3 * INNER].reshape(DIM, HEADS, DIM_HEAD)
        wo = lyr["w_o"].reshape(HEADS, DIM_HEAD, DIM)
        wvo = jnp.einsum("dhk,hke->dhe", wv, wo).reshape(DIM, HEADS * DIM)  # fold to_out
        wproj = jnp.concatenate([wq, wk, wvo], axis=1)             # (32, 128) lane-dense
        slab = jnp.zeros((W_ROWS, 128), jnp.float32)
        slab = slab.at[0:DIM, :].set(wproj)
        slab = slab.at[DIM:2 * DIM, 0:MLP_DIM].set(lyr["w1"])
        slab = slab.at[2 * DIM:2 * DIM + MLP_DIM, 0:DIM].set(lyr["w2"])
        wslabs.append(slab)
    wbuf = jnp.stack(wslabs).astype(MXU_DTYPE)                     # (L, 128, 128) bf16

    vbuf = jnp.zeros((V_STRIDE * L + 8, 128), jnp.float32)
    for i, lyr in enumerate(layers):
        r = V_STRIDE * i
        vbuf = vbuf.at[r + 0, 0:DIM].set(lyr["ln1_g"])
        vbuf = vbuf.at[r + 1, 0:DIM].set(lyr["ln1_b"])
        vbuf = vbuf.at[r + 2, 0:DIM].set(lyr["b_o"])
        vbuf = vbuf.at[r + 3, 0:DIM].set(lyr["ln2_g"])
        vbuf = vbuf.at[r + 4, 0:DIM].set(lyr["ln2_b"])
        vbuf = vbuf.at[r + 5, 0:MLP_DIM].set(lyr["b1"])
        vbuf = vbuf.at[r + 6, 0:DIM].set(lyr["b2"])
    vbuf = vbuf.at[V_STRIDE * L + 0, 0:DIM].set(final["g"])
    vbuf = vbuf.at[V_STRIDE * L + 1, 0:DIM].set(final["b"])
    return wbuf, vbuf


# ---------------------------------------------------------------------------
# Pure-JAX reference that mirrors the PyTorch module exactly (parity check).
# ---------------------------------------------------------------------------
def reference_forward(x, layers, final):
    def ln(v, g, b):
        m = jnp.mean(v, axis=-1, keepdims=True)
        var = jnp.mean(jnp.square(v - m), axis=-1, keepdims=True)
        return (v - m) * jax.lax.rsqrt(var + EPS) * g + b

    B, N, _ = x.shape
    for l in layers:
        h = ln(x, l["ln1_g"], l["ln1_b"])
        qkv = h @ l["w_qkv"]
        q, k, v = jnp.split(qkv, 3, axis=-1)

        def heads(t):
            return t.reshape(B, N, HEADS, DIM_HEAD).transpose(0, 2, 1, 3)

        q, k, v = heads(q), heads(k), heads(v)
        s = jnp.einsum("bhqd,bhkd->bhqk", q, k) * SCALE
        p = jax.nn.softmax(s, axis=-1)
        o = jnp.einsum("bhqk,bhkd->bhqd", p, v)
        o = o.transpose(0, 2, 1, 3).reshape(B, N, INNER)
        x = x + o @ l["w_o"] + l["b_o"]
        h2 = ln(x, l["ln2_g"], l["ln2_b"])
        h2 = jax.nn.gelu(h2 @ l["w1"] + l["b1"], approximate=False)
        x = x + h2 @ l["w2"] + l["b2"]
    return ln(x, final["g"], final["b"])


if __name__ == "__main__":
    key = jax.random.PRNGKey(0)
    kx, kp = jax.random.split(key)
    B, N = 2, 8
    x = jax.random.normal(kx, (B, N, DIM), dtype=jnp.float32)

    layers, final = init_params(kp)
    wbuf, vbuf = pack_params(layers, final)

    out = jax.block_until_ready(transformer_forward(x, wbuf, vbuf))

    assert out.shape == (B, N, DIM)
    assert bool(jnp.all(jnp.isfinite(out)))

    ref = reference_forward(x, layers, final)
    # bf16 MXU operands + approx reciprocal + tanh GELU + wv@wo folding vs. the
    # exact-f32 torch-mirror reference: observed error is O(1e-3); 3e-2 budget.
    assert bool(jnp.allclose(out, ref, atol=3e-2, rtol=3e-2)), \
        float(jnp.max(jnp.abs(out - ref)))

    print("KERNEL_OK")
</pallas_src>

<mosaic_0001>
module attributes {stable_mosaic.version = 11 : i64} {
  func.func @_fused_kernel(%arg0: i32, %arg1: memref<2x8x32xf32, #tpu.memory_space<vmem>>, %arg2: memref<2x128x128xbf16, #tpu.memory_space<vmem>>, %arg3: memref<24x128xf32, #tpu.memory_space<vmem>>, %arg4: memref<2x8x32xf32, #tpu.memory_space<vmem>>) attributes {dimension_semantics = [#tpu.dimension_semantics<arbitrary>], iteration_bounds = array<i64: 1>, scalar_prefetch = 0 : i64, scratch_operands = 0 : i64, tpu.core_type = #tpu.core_type<tc>, window_params = [{pipeline_mode = #tpu.pipeline_mode<synchronous>, transform_indices = @transform_0, window_bounds = array<i64: 2, 8, 32>}, {pipeline_mode = #tpu.pipeline_mode<synchronous>, transform_indices = @transform_1, window_bounds = array<i64: 2, 128, 128>}, {pipeline_mode = #tpu.pipeline_mode<synchronous>, transform_indices = @transform_2, window_bounds = array<i64: 24, 128>}, {pipeline_mode = #tpu.pipeline_mode<synchronous>, transform_indices = @transform_3, window_bounds = array<i64: 2, 8, 32>}]} {
    %c0 = arith.constant 0 : index
    %c0_0 = arith.constant 0 : index
    %c0_1 = arith.constant 0 : index
    %0 = vector.load %arg1[%c0, %c0_0, %c0_1] : memref<2x8x32xf32, #tpu.memory_space<vmem>>, vector<2x8x32xf32>
    %1 = vector.shape_cast %0 : vector<2x8x32xf32> to vector<16x32xf32>
    %c0_2 = arith.constant 0 : index
    %c0_3 = arith.constant 0 : index
    %2 = vector.load %arg3[%c0_2, %c0_3] : memref<24x128xf32, #tpu.memory_space<vmem>>, vector<1x32xf32>
    %c1 = arith.constant 1 : index
    %c0_4 = arith.constant 0 : index
    %3 = vector.load %arg3[%c1, %c0_4] : memref<24x128xf32, #tpu.memory_space<vmem>>, vector<1x32xf32>
    %c2 = arith.constant 2 : index
    %c0_5 = arith.constant 0 : index
    %4 = vector.load %arg3[%c2, %c0_5] : memref<24x128xf32, #tpu.memory_space<vmem>>, vector<1x32xf32>
    %c3 = arith.constant 3 : index
    %c0_6 = arith.constant 0 : index
    %5 = vector.load %arg3[%c3, %c0_6] : memref<24x128xf32, #tpu.memory_space<vmem>>, vector<1x32xf32>
    %c4 = arith.constant 4 : index
    %c0_7 = arith.constant 0 : index
    %6 = vector.load %arg3[%c4, %c0_7] : memref<24x128xf32, #tpu.memory_space<vmem>>, vector<1x32xf32>
    %c5 = arith.constant 5 : index
    %c0_8 = arith.constant 0 : index
    %7 = vector.load %arg3[%c5, %c0_8] : memref<24x128xf32, #tpu.memory_space<vmem>>, vector<1x64xf32>
    %c6 = arith.constant 6 : index
    %c0_9 = arith.constant 0 : index
    %8 = vector.load %arg3[%c6, %c0_9] : memref<24x128xf32, #tpu.memory_space<vmem>>, vector<1x32xf32>
    %c0_10 = arith.constant 0 : index
    %c0_11 = arith.constant 0 : index
    %c0_12 = arith.constant 0 : index
    %9 = vector.load %arg2[%c0_10, %c0_11, %c0_12] : memref<2x128x128xbf16, #tpu.memory_space<vmem>>, vector<1x128x128xbf16>
    %10 = vector.shape_cast %9 : vector<1x128x128xbf16> to vector<128x128xbf16>
    %11 = vector.extract_strided_slice %10 {offsets = [0, 0], sizes = [32, 128], strides = [1, 1]} : vector<128x128xbf16> to vector<32x128xbf16>
    %12 = vector.extract_strided_slice %10 {offsets = [32, 0], sizes = [32, 64], strides = [1, 1]} : vector<128x128xbf16> to vector<32x64xbf16>
    %13 = vector.extract_strided_slice %10 {offsets = [64, 0], sizes = [64, 32], strides = [1, 1]} : vector<128x128xbf16> to vector<64x32xbf16>
    %cst = arith.constant dense<0.000000e+00> : vector<16xf32>
    %14 = vector.multi_reduction <add>, %1, %cst [1] : vector<16x32xf32> to vector<16xf32>
    %15 = vector.shape_cast %14 : vector<16xf32> to vector<16x1xf32>
    %cst_13 = arith.constant 3.200000e+01 : f32
    %16 = vector.broadcast %cst_13 : f32 to vector<16x1xf32>
    %17 = arith.divf %15, %16 : vector<16x1xf32>
    %18 = vector.broadcast %17 : vector<16x1xf32> to vector<16x32xf32>
    %19 = arith.subf %1, %18 : vector<16x32xf32>
    %20 = arith.mulf %19, %19 : vector<16x32xf32>
    %cst_14 = arith.constant dense<0.000000e+00> : vector<16xf32>
    %21 = vector.multi_reduction <add>, %20, %cst_14 [1] : vector<16x32xf32> to vector<16xf32>
    %22 = vector.shape_cast %21 : vector<16xf32> to vector<16x1xf32>
    %cst_15 = arith.constant 3.200000e+01 : f32
    %23 = vector.broadcast %cst_15 : f32 to vector<16x1xf32>
    %24 = arith.divf %22, %23 : vector<16x1xf32>
    %25 = vector.broadcast %17 : vector<16x1xf32> to vector<16x32xf32>
    %26 = arith.subf %1, %25 : vector<16x32xf32>
    %cst_16 = arith.constant 9.99999974E-6 : f32
    %27 = vector.broadcast %cst_16 : f32 to vector<16x1xf32>
    %28 = arith.addf %24, %27 : vector<16x1xf32>
    %29 = math.rsqrt %28 : vector<16x1xf32>
    %30 = vector.broadcast %29 : vector<16x1xf32> to vector<16x32xf32>
    %31 = arith.mulf %26, %30 : vector<16x32xf32>
    %32 = vector.broadcast %2 : vector<1x32xf32> to vector<16x32xf32>
    %33 = arith.mulf %31, %32 : vector<16x32xf32>
    %34 = vector.broadcast %3 : vector<1x32xf32> to vector<16x32xf32>
    %35 = arith.addf %33, %34 : vector<16x32xf32>
    %36 = arith.truncf %35 : vector<16x32xf32> to vector<16x32xbf16>
    %cst_17 = arith.constant dense<0.000000e+00> : vector<16x128xf32>
    %37 = tpu.matmul %36, %11, %cst_17 {dimension_numbers = #tpu.dot_dimension_numbers<[1], [0], [0], [1], [0, 0, 1, 1], [], []>} : vector<16x32xbf16>, vector<32x128xbf16>, vector<16x128xf32> -> vector<16x128xf32>
    %38 = vector.extract_strided_slice %37 {offsets = [0, 0], sizes = [16, 16], strides = [1, 1]} : vector<16x128xf32> to vector<16x16xf32>
    %39 = vector.shape_cast %38 : vector<16x16xf32> to vector<2x8x16xf32>
    %40 = vector.extract_strided_slice %37 {offsets = [0, 32], sizes = [16, 16], strides = [1, 1]} : vector<16x128xf32> to vector<16x16xf32>
    %41 = vector.shape_cast %40 : vector<16x16xf32> to vector<2x8x16xf32>
    %42 = vector.extract_strided_slice %37 {offsets = [0, 64], sizes = [16, 32], strides = [1, 1]} : vector<16x128xf32> to vector<16x32xf32>
    %43 = vector.shape_cast %42 : vector<16x32xf32> to vector<2x8x32xf32>
    %44 = arith.truncf %39 : vector<2x8x16xf32> to vector<2x8x16xbf16>
    %45 = arith.truncf %41 : vector<2x8x16xf32> to vector<2x8x16xbf16>
    "tpu.trace_start"() <{level = 10 : i32, message = "bqd,bkd->bqk"}> : () -> ()
    %cst_18 = arith.constant dense<0.000000e+00> : vector<2x8x8xf32>
    %46 = tpu.matmul %44, %45, %cst_18 {dimension_numbers = #tpu.dot_dimension_numbers<[2], [2], [1], [1], [0, 0, 0, 1, 1, 1], [0], [0]>} : vector<2x8x16xbf16>, vector<2x8x16xbf16>, vector<2x8x8xf32> -> vector<2x8x8xf32>
    "tpu.trace_stop"() : () -> ()
    %cst_19 = arith.constant dense<0xFF800000> : vector<2x8xf32>
    %47 = vector.multi_reduction <maximumf>, %46, %cst_19 [2] : vector<2x8x8xf32> to vector<2x8xf32>
    %48 = vector.shape_cast %47 : vector<2x8xf32> to vector<2x8x1xf32>
    %49 = vector.broadcast %48 : vector<2x8x1xf32> to vector<2x8x8xf32>
    %50 = arith.subf %46, %49 : vector<2x8x8xf32>
    %51 = math.exp %50 : vector<2x8x8xf32>
    %cst_20 = arith.constant dense<0.000000e+00> : vector<2x8xf32>
    %52 = vector.multi_reduction <add>, %51, %cst_20 [2] : vector<2x8x8xf32> to vector<2x8xf32>
    %53 = vector.shape_cast %52 : vector<2x8xf32> to vector<2x8x1xf32>
    %54 = tpu.reciprocal %53 {approx = true} : vector<2x8x1xf32> -> vector<2x8x1xf32>
    %55 = vector.broadcast %54 : vector<2x8x1xf32> to vector<2x8x8xf32>
    %56 = arith.mulf %51, %55 : vector<2x8x8xf32>
    %57 = arith.truncf %56 : vector<2x8x8xf32> to vector<2x8x8xbf16>
    %58 = arith.truncf %43 : vector<2x8x32xf32> to vector<2x8x32xbf16>
    "tpu.trace_start"() <{level = 10 : i32, message = "bqk,bkd->bqd"}> : () -> ()
    %cst_21 = arith.constant dense<0.000000e+00> : vector<2x8x32xf32>
    %59 = tpu.matmul %57, %58, %cst_21 {dimension_numbers = #tpu.dot_dimension_numbers<[2], [1], [1], [2], [0, 0, 0, 1, 1, 2], [0], [0]>} : vector<2x8x8xbf16>, vector<2x8x32xbf16>, vector<2x8x32xf32> -> vector<2x8x32xf32>
    "tpu.trace_stop"() : () -> ()
    %60 = vector.extract_strided_slice %37 {offsets = [0, 16], sizes = [16, 16], strides = [1, 1]} : vector<16x128xf32> to vector<16x16xf32>
    %61 = vector.shape_cast %60 : vector<16x16xf32> to vector<2x8x16xf32>
    %62 = vector.extract_strided_slice %37 {offsets = [0, 48], sizes = [16, 16], strides = [1, 1]} : vector<16x128xf32> to vector<16x16xf32>
    %63 = vector.shape_cast %62 : vector<16x16xf32> to vector<2x8x16xf32>
    %64 = vector.extract_strided_slice %37 {offsets = [0, 96], sizes = [16, 32], strides = [1, 1]} : vector<16x128xf32> to vector<16x32xf32>
    %65 = vector.shape_cast %64 : vector<16x32xf32> to vector<2x8x32xf32>
    %66 = arith.truncf %61 : vector<2x8x16xf32> to vector<2x8x16xbf16>
    %67 = arith.truncf %63 : vector<2x8x16xf32> to vector<2x8x16xbf16>
    "tpu.trace_start"() <{level = 10 : i32, message = "bqd,bkd->bqk"}> : () -> ()
    %cst_22 = arith.constant dense<0.000000e+00> : vector<2x8x8xf32>
    %68 = tpu.matmul %66, %67, %cst_22 {dimension_numbers = #tpu.dot_dimension_numbers<[2], [2], [1], [1], [0, 0, 0, 1, 1, 1], [0], [0]>} : vector<2x8x16xbf16>, vector<2x8x16xbf16>, vector<2x8x8xf32> -> vector<2x8x8xf32>
    "tpu.trace_stop"() : () -> ()
    %cst_23 = arith.constant dense<0xFF800000> : vector<2x8xf32>
    %69 = vector.multi_reduction <maximumf>, %68, %cst_23 [2] : vector<2x8x8xf32> to vector<2x8xf32>
    %70 = vector.shape_cast %69 : vector<2x8xf32> to vector<2x8x1xf32>
    %71 = vector.broadcast %70 : vector<2x8x1xf32> to vector<2x8x8xf32>
    %72 = arith.subf %68, %71 : vector<2x8x8xf32>
    %73 = math.exp %72 : vector<2x8x8xf32>
    %cst_24 = arith.constant dense<0.000000e+00> : vector<2x8xf32>
    %74 = vector.multi_reduction <add>, %73, %cst_24 [2] : vector<2x8x8xf32> to vector<2x8xf32>
    %75 = vector.shape_cast %74 : vector<2x8xf32> to vector<2x8x1xf32>
    %76 = tpu.reciprocal %75 {approx = true} : vector<2x8x1xf32> -> vector<2x8x1xf32>
    %77 = vector.broadcast %76 : vector<2x8x1xf32> to vector<2x8x8xf32>
    %78 = arith.mulf %73, %77 : vector<2x8x8xf32>
    %79 = arith.truncf %78 : vector<2x8x8xf32> to vector<2x8x8xbf16>
    %80 = arith.truncf %65 : vector<2x8x32xf32> to vector<2x8x32xbf16>
    "tpu.trace_start"() <{level = 10 : i32, message = "bqk,bkd->bqd"}> : () -> ()
    %cst_25 = arith.constant dense<0.000000e+00> : vector<2x8x32xf32>
    %81 = tpu.matmul %79, %80, %cst_25 {dimension_numbers = #tpu.dot_dimension_numbers<[2], [1], [1], [2], [0, 0, 0, 1, 1, 2], [0], [0]>} : vector<2x8x8xbf16>, vector<2x8x32xbf16>, vector<2x8x32xf32> -> vector<2x8x32xf32>
    "tpu.trace_stop"() : () -> ()
    %82 = arith.addf %59, %81 : vector<2x8x32xf32>
    %83 = vector.shape_cast %82 : vector<2x8x32xf32> to vector<16x32xf32>
    %84 = arith.addf %1, %83 : vector<16x32xf32>
    %85 = vector.broadcast %4 : vector<1x32xf32> to vector<16x32xf32>
    %86 = arith.addf %84, %85 : vector<16x32xf32>
    %cst_26 = arith.constant dense<0.000000e+00> : vector<16xf32>
    %87 = vector.multi_reduction <add>, %86, %cst_26 [1] : vector<16x32xf32> to vector<16xf32>
    %88 = vector.shape_cast %87 : vector<16xf32> to vector<16x1xf32>
    %cst_27 = arith.constant 3.200000e+01 : f32
    %89 = vector.broadcast %cst_27 : f32 to vector<16x1xf32>
    %90 = arith.divf %88, %89 : vector<16x1xf32>
    %91 = vector.broadcast %90 : vector<16x1xf32> to vector<16x32xf32>
    %92 = arith.subf %86, %91 : vector<16x32xf32>
    %93 = arith.mulf %92, %92 : vector<16x32xf32>
    %cst_28 = arith.constant dense<0.000000e+00> : vector<16xf32>
    %94 = vector.multi_reduction <add>, %93, %cst_28 [1] : vector<16x32xf32> to vector<16xf32>
    %95 = vector.shape_cast %94 : vector<16xf32> to vector<16x1xf32>
    %cst_29 = arith.constant 3.200000e+01 : f32
    %96 = vector.broadcast %cst_29 : f32 to vector<16x1xf32>
    %97 = arith.divf %95, %96 : vector<16x1xf32>
    %98 = vector.broadcast %90 : vector<16x1xf32> to vector<16x32xf32>
    %99 = arith.subf %86, %98 : vector<16x32xf32>
    %cst_30 = arith.constant 9.99999974E-6 : f32
    %100 = vector.broadcast %cst_30 : f32 to vector<16x1xf32>
    %101 = arith.addf %97, %100 : vector<16x1xf32>
    %102 = math.rsqrt %101 : vector<16x1xf32>
    %103 = vector.broadcast %102 : vector<16x1xf32> to vector<16x32xf32>
    %104 = arith.mulf %99, %103 : vector<16x32xf32>
    %105 = vector.broadcast %5 : vector<1x32xf32> to vector<16x32xf32>
    %106 = arith.mulf %104, %105 : vector<16x32xf32>
    %107 = vector.broadcast %6 : vector<1x32xf32> to vector<16x32xf32>
    %108 = arith.addf %106, %107 : vector<16x32xf32>
    %109 = arith.truncf %108 : vector<16x32xf32> to vector<16x32xbf16>
    %cst_31 = arith.constant dense<0.000000e+00> : vector<16x64xf32>
    %110 = tpu.matmul %109, %12, %cst_31 {dimension_numbers = #tpu.dot_dimension_numbers<[1], [0], [0], [1], [0, 0, 1, 1], [], []>} : vector<16x32xbf16>, vector<32x64xbf16>, vector<16x64xf32> -> vector<16x64xf32>
    %111 = vector.broadcast %7 : vector<1x64xf32> to vector<16x64xf32>
    %112 = arith.addf %110, %111 : vector<16x64xf32>
    %113 = arith.mulf %112, %112 : vector<16x64xf32>
    %114 = arith.mulf %112, %113 : vector<16x64xf32>
    %cst_32 = arith.constant 4.471500e-02 : f32
    %115 = vector.broadcast %cst_32 : f32 to vector<16x64xf32>
    %116 = arith.mulf %115, %114 : vector<16x64xf32>
    %117 = arith.addf %112, %116 : vector<16x64xf32>
    %cst_33 = arith.constant 0.797884583 : f32
    %118 = vector.broadcast %cst_33 : f32 to vector<16x64xf32>
    %119 = arith.mulf %118, %117 : vector<16x64xf32>
    %120 = math.tanh %119 : vector<16x64xf32>
    %cst_34 = arith.constant 1.000000e+00 : f32
    %121 = vector.broadcast %cst_34 : f32 to vector<16x64xf32>
    %122 = arith.addf %121, %120 : vector<16x64xf32>
    %cst_35 = arith.constant 5.000000e-01 : f32
    %123 = vector.broadcast %cst_35 : f32 to vector<16x64xf32>
    %124 = arith.mulf %123, %122 : vector<16x64xf32>
    %125 = arith.mulf %112, %124 : vector<16x64xf32>
    %126 = arith.truncf %125 : vector<16x64xf32> to vector<16x64xbf16>
    %cst_36 = arith.constant dense<0.000000e+00> : vector<16x32xf32>
    %127 = tpu.matmul %126, %13, %cst_36 {dimension_numbers = #tpu.dot_dimension_numbers<[1], [0], [0], [1], [0, 0, 1, 1], [], []>} : vector<16x64xbf16>, vector<64x32xbf16>, vector<16x32xf32> -> vector<16x32xf32>
    %128 = vector.broadcast %8 : vector<1x32xf32> to vector<16x32xf32>
    %129 = arith.addf %127, %128 : vector<16x32xf32>
    %130 = arith.addf %86, %129 : vector<16x32xf32>
    %c8 = arith.constant 8 : index
    %c0_37 = arith.constant 0 : index
    %131 = vector.load %arg3[%c8, %c0_37] : memref<24x128xf32, #tpu.memory_space<vmem>>, vector<1x32xf32>
    %c9 = arith.constant 9 : index
    %c0_38 = arith.constant 0 : index
    %132 = vector.load %arg3[%c9, %c0_38] : memref<24x128xf32, #tpu.memory_space<vmem>>, vector<1x32xf32>
    %c10 = arith.constant 10 : index
    %c0_39 = arith.constant 0 : index
    %133 = vector.load %arg3[%c10, %c0_39] : memref<24x128xf32, #tpu.memory_space<vmem>>, vector<1x32xf32>
    %c11 = arith.constant 11 : index
    %c0_40 = arith.constant 0 : index
    %134 = vector.load %arg3[%c11, %c0_40] : memref<24x128xf32, #tpu.memory_space<vmem>>, vector<1x32xf32>
    %c12 = arith.constant 12 : index
    %c0_41 = arith.constant 0 : index
    %135 = vector.load %arg3[%c12, %c0_41] : memref<24x128xf32, #tpu.memory_space<vmem>>, vector<1x32xf32>
    %c13 = arith.constant 13 : index
    %c0_42 = arith.constant 0 : index
    %136 = vector.load %arg3[%c13, %c0_42] : memref<24x128xf32, #tpu.memory_space<vmem>>, vector<1x64xf32>
    %c14 = arith.constant 14 : index
    %c0_43 = arith.constant 0 : index
    %137 = vector.load %arg3[%c14, %c0_43] : memref<24x128xf32, #tpu.memory_space<vmem>>, vector<1x32xf32>
    %c1_44 = arith.constant 1 : index
    %c0_45 = arith.constant 0 : index
    %c0_46 = arith.constant 0 : index
    %138 = vector.load %arg2[%c1_44, %c0_45, %c0_46] : memref<2x128x128xbf16, #tpu.memory_space<vmem>>, vector<1x128x128xbf16>
    %139 = vector.shape_cast %138 : vector<1x128x128xbf16> to vector<128x128xbf16>
    %140 = vector.extract_strided_slice %139 {offsets = [0, 0], sizes = [32, 128], strides = [1, 1]} : vector<128x128xbf16> to vector<32x128xbf16>
    %141 = vector.extract_strided_slice %139 {offsets = [32, 0], sizes = [32, 64], strides = [1, 1]} : vector<128x128xbf16> to vector<32x64xbf16>
    %142 = vector.extract_strided_slice %139 {offsets = [64, 0], sizes = [64, 32], strides = [1, 1]} : vector<128x128xbf16> to vector<64x32xbf16>
    %cst_47 = arith.constant dense<0.000000e+00> : vector<16xf32>
    %143 = vector.multi_reduction <add>, %130, %cst_47 [1] : vector<16x32xf32> to vector<16xf32>
    %144 = vector.shape_cast %143 : vector<16xf32> to vector<16x1xf32>
    %cst_48 = arith.constant 3.200000e+01 : f32
    %145 = vector.broadcast %cst_48 : f32 to vector<16x1xf32>
    %146 = arith.divf %144, %145 : vector<16x1xf32>
    %147 = vector.broadcast %146 : vector<16x1xf32> to vector<16x32xf32>
    %148 = arith.subf %130, %147 : vector<16x32xf32>
    %149 = arith.mulf %148, %148 : vector<16x32xf32>
    %cst_49 = arith.constant dense<0.000000e+00> : vector<16xf32>
    %150 = vector.multi_reduction <add>, %149, %cst_49 [1] : vector<16x32xf32> to vector<16xf32>
    %151 = vector.shape_cast %150 : vector<16xf32> to vector<16x1xf32>
    %cst_50 = arith.constant 3.200000e+01 : f32
    %152 = vector.broadcast %cst_50 : f32 to vector<16x1xf32>
    %153 = arith.divf %151, %152 : vector<16x1xf32>
    %154 = vector.broadcast %146 : vector<16x1xf32> to vector<16x32xf32>
    %155 = arith.subf %130, %154 : vector<16x32xf32>
    %cst_51 = arith.constant 9.99999974E-6 : f32
    %156 = vector.broadcast %cst_51 : f32 to vector<16x1xf32>
    %157 = arith.addf %153, %156 : vector<16x1xf32>
    %158 = math.rsqrt %157 : vector<16x1xf32>
    %159 = vector.broadcast %158 : vector<16x1xf32> to vector<16x32xf32>
    %160 = arith.mulf %155, %159 : vector<16x32xf32>
    %161 = vector.broadcast %131 : vector<1x32xf32> to vector<16x32xf32>
    %162 = arith.mulf %160, %161 : vector<16x32xf32>
    %163 = vector.broadcast %132 : vector<1x32xf32> to vector<16x32xf32>
    %164 = arith.addf %162, %163 : vector<16x32xf32>
    %165 = arith.truncf %164 : vector<16x32xf32> to vector<16x32xbf16>
    %cst_52 = arith.constant dense<0.000000e+00> : vector<16x128xf32>
    %166 = tpu.matmul %165, %140, %cst_52 {dimension_numbers = #tpu.dot_dimension_numbers<[1], [0], [0], [1], [0, 0, 1, 1], [], []>} : vector<16x32xbf16>, vector<32x128xbf16>, vector<16x128xf32> -> vector<16x128xf32>
    %167 = vector.extract_strided_slice %166 {offsets = [0, 0], sizes = [16, 16], strides = [1, 1]} : vector<16x128xf32> to vector<16x16xf32>
    %168 = vector.shape_cast %167 : vector<16x16xf32> to vector<2x8x16xf32>
    %169 = vector.extract_strided_slice %166 {offsets = [0, 32], sizes = [16, 16], strides = [1, 1]} : vector<16x128xf32> to vector<16x16xf32>
    %170 = vector.shape_cast %169 : vector<16x16xf32> to vector<2x8x16xf32>
    %171 = vector.extract_strided_slice %166 {offsets = [0, 64], sizes = [16, 32], strides = [1, 1]} : vector<16x128xf32> to vector<16x32xf32>
    %172 = vector.shape_cast %171 : vector<16x32xf32> to vector<2x8x32xf32>
    %173 = arith.truncf %168 : vector<2x8x16xf32> to vector<2x8x16xbf16>
    %174 = arith.truncf %170 : vector<2x8x16xf32> to vector<2x8x16xbf16>
    "tpu.trace_start"() <{level = 10 : i32, message = "bqd,bkd->bqk"}> : () -> ()
    %cst_53 = arith.constant dense<0.000000e+00> : vector<2x8x8xf32>
    %175 = tpu.matmul %173, %174, %cst_53 {dimension_numbers = #tpu.dot_dimension_numbers<[2], [2], [1], [1], [0, 0, 0, 1, 1, 1], [0], [0]>} : vector<2x8x16xbf16>, vector<2x8x16xbf16>, vector<2x8x8xf32> -> vector<2x8x8xf32>
    "tpu.trace_stop"() : () -> ()
    %cst_54 = arith.constant dense<0xFF800000> : vector<2x8xf32>
    %176 = vector.multi_reduction <maximumf>, %175, %cst_54 [2] : vector<2x8x8xf32> to vector<2x8xf32>
    %177 = vector.shape_cast %176 : vector<2x8xf32> to vector<2x8x1xf32>
    %178 = vector.broadcast %177 : vector<2x8x1xf32> to vector<2x8x8xf32>
    %179 = arith.subf %175, %178 : vector<2x8x8xf32>
    %180 = math.exp %179 : vector<2x8x8xf32>
    %cst_55 = arith.constant dense<0.000000e+00> : vector<2x8xf32>
    %181 = vector.multi_reduction <add>, %180, %cst_55 [2] : vector<2x8x8xf32> to vector<2x8xf32>
    %182 = vector.shape_cast %181 : vector<2x8xf32> to vector<2x8x1xf32>
    %183 = tpu.reciprocal %182 {approx = true} : vector<2x8x1xf32> -> vector<2x8x1xf32>
    %184 = vector.broadcast %183 : vector<2x8x1xf32> to vector<2x8x8xf32>
    %185 = arith.mulf %180, %184 : vector<2x8x8xf32>
    %186 = arith.truncf %185 : vector<2x8x8xf32> to vector<2x8x8xbf16>
    %187 = arith.truncf %172 : vector<2x8x32xf32> to vector<2x8x32xbf16>
    "tpu.trace_start"() <{level = 10 : i32, message = "bqk,bkd->bqd"}> : () -> ()
    %cst_56 = arith.constant dense<0.000000e+00> : vector<2x8x32xf32>
    %188 = tpu.matmul %186, %187, %cst_56 {dimension_numbers = #tpu.dot_dimension_numbers<[2], [1], [1], [2], [0, 0, 0, 1, 1, 2], [0], [0]>} : vector<2x8x8xbf16>, vector<2x8x32xbf16>, vector<2x8x32xf32> -> vector<2x8x32xf32>
    "tpu.trace_stop"() : () -> ()
    %189 = vector.extract_strided_slice %166 {offsets = [0, 16], sizes = [16, 16], strides = [1, 1]} : vector<16x128xf32> to vector<16x16xf32>
    %190 = vector.shape_cast %189 : vector<16x16xf32> to vector<2x8x16xf32>
    %191 = vector.extract_strided_slice %166 {offsets = [0, 48], sizes = [16, 16], strides = [1, 1]} : vector<16x128xf32> to vector<16x16xf32>
    %192 = vector.shape_cast %191 : vector<16x16xf32> to vector<2x8x16xf32>
    %193 = vector.extract_strided_slice %166 {offsets = [0, 96], sizes = [16, 32], strides = [1, 1]} : vector<16x128xf32> to vector<16x32xf32>
    %194 = vector.shape_cast %193 : vector<16x32xf32> to vector<2x8x32xf32>
    %195 = arith.truncf %190 : vector<2x8x16xf32> to vector<2x8x16xbf16>
    %196 = arith.truncf %192 : vector<2x8x16xf32> to vector<2x8x16xbf16>
    "tpu.trace_start"() <{level = 10 : i32, message = "bqd,bkd->bqk"}> : () -> ()
    %cst_57 = arith.constant dense<0.000000e+00> : vector<2x8x8xf32>
    %197 = tpu.matmul %195, %196, %cst_57 {dimension_numbers = #tpu.dot_dimension_numbers<[2], [2], [1], [1], [0, 0, 0, 1, 1, 1], [0], [0]>} : vector<2x8x16xbf16>, vector<2x8x16xbf16>, vector<2x8x8xf32> -> vector<2x8x8xf32>
    "tpu.trace_stop"() : () -> ()
    %cst_58 = arith.constant dense<0xFF800000> : vector<2x8xf32>
    %198 = vector.multi_reduction <maximumf>, %197, %cst_58 [2] : vector<2x8x8xf32> to vector<2x8xf32>
    %199 = vector.shape_cast %198 : vector<2x8xf32> to vector<2x8x1xf32>
    %200 = vector.broadcast %199 : vector<2x8x1xf32> to vector<2x8x8xf32>
    %201 = arith.subf %197, %200 : vector<2x8x8xf32>
    %202 = math.exp %201 : vector<2x8x8xf32>
    %cst_59 = arith.constant dense<0.000000e+00> : vector<2x8xf32>
    %203 = vector.multi_reduction <add>, %202, %cst_59 [2] : vector<2x8x8xf32> to vector<2x8xf32>
    %204 = vector.shape_cast %203 : vector<2x8xf32> to vector<2x8x1xf32>
    %205 = tpu.reciprocal %204 {approx = true} : vector<2x8x1xf32> -> vector<2x8x1xf32>
    %206 = vector.broadcast %205 : vector<2x8x1xf32> to vector<2x8x8xf32>
    %207 = arith.mulf %202, %206 : vector<2x8x8xf32>
    %208 = arith.truncf %207 : vector<2x8x8xf32> to vector<2x8x8xbf16>
    %209 = arith.truncf %194 : vector<2x8x32xf32> to vector<2x8x32xbf16>
    "tpu.trace_start"() <{level = 10 : i32, message = "bqk,bkd->bqd"}> : () -> ()
    %cst_60 = arith.constant dense<0.000000e+00> : vector<2x8x32xf32>
    %210 = tpu.matmul %208, %209, %cst_60 {dimension_numbers = #tpu.dot_dimension_numbers<[2], [1], [1], [2], [0, 0, 0, 1, 1, 2], [0], [0]>} : vector<2x8x8xbf16>, vector<2x8x32xbf16>, vector<2x8x32xf32> -> vector<2x8x32xf32>
    "tpu.trace_stop"() : () -> ()
    %211 = arith.addf %188, %210 : vector<2x8x32xf32>
    %212 = vector.shape_cast %211 : vector<2x8x32xf32> to vector<16x32xf32>
    %213 = arith.addf %130, %212 : vector<16x32xf32>
    %214 = vector.broadcast %133 : vector<1x32xf32> to vector<16x32xf32>
    %215 = arith.addf %213, %214 : vector<16x32xf32>
    %cst_61 = arith.constant dense<0.000000e+00> : vector<16xf32>
    %216 = vector.multi_reduction <add>, %215, %cst_61 [1] : vector<16x32xf32> to vector<16xf32>
    %217 = vector.shape_cast %216 : vector<16xf32> to vector<16x1xf32>
    %cst_62 = arith.constant 3.200000e+01 : f32
    %218 = vector.broadcast %cst_62 : f32 to vector<16x1xf32>
    %219 = arith.divf %217, %218 : vector<16x1xf32>
    %220 = vector.broadcast %219 : vector<16x1xf32> to vector<16x32xf32>
    %221 = arith.subf %215, %220 : vector<16x32xf32>
    %222 = arith.mulf %221, %221 : vector<16x32xf32>
    %cst_63 = arith.constant dense<0.000000e+00> : vector<16xf32>
    %223 = vector.multi_reduction <add>, %222, %cst_63 [1] : vector<16x32xf32> to vector<16xf32>
    %224 = vector.shape_cast %223 : vector<16xf32> to vector<16x1xf32>
    %cst_64 = arith.constant 3.200000e+01 : f32
    %225 = vector.broadcast %cst_64 : f32 to vector<16x1xf32>
    %226 = arith.divf %224, %225 : vector<16x1xf32>
    %227 = vector.broadcast %219 : vector<16x1xf32> to vector<16x32xf32>
    %228 = arith.subf %215, %227 : vector<16x32xf32>
    %cst_65 = arith.constant 9.99999974E-6 : f32
    %229 = vector.broadcast %cst_65 : f32 to vector<16x1xf32>
    %230 = arith.addf %226, %229 : vector<16x1xf32>
    %231 = math.rsqrt %230 : vector<16x1xf32>
    %232 = vector.broadcast %231 : vector<16x1xf32> to vector<16x32xf32>
    %233 = arith.mulf %228, %232 : vector<16x32xf32>
    %234 = vector.broadcast %134 : vector<1x32xf32> to vector<16x32xf32>
    %235 = arith.mulf %233, %234 : vector<16x32xf32>
    %236 = vector.broadcast %135 : vector<1x32xf32> to vector<16x32xf32>
    %237 = arith.addf %235, %236 : vector<16x32xf32>
    %238 = arith.truncf %237 : vector<16x32xf32> to vector<16x32xbf16>
    %cst_66 = arith.constant dense<0.000000e+00> : vector<16x64xf32>
    %239 = tpu.matmul %238, %141, %cst_66 {dimension_numbers = #tpu.dot_dimension_numbers<[1], [0], [0], [1], [0, 0, 1, 1], [], []>} : vector<16x32xbf16>, vector<32x64xbf16>, vector<16x64xf32> -> vector<16x64xf32>
    %240 = vector.broadcast %136 : vector<1x64xf32> to vector<16x64xf32>
    %241 = arith.addf %239, %240 : vector<16x64xf32>
    %242 = arith.mulf %241, %241 : vector<16x64xf32>
    %243 = arith.mulf %241, %242 : vector<16x64xf32>
    %cst_67 = arith.constant 4.471500e-02 : f32
    %244 = vector.broadcast %cst_67 : f32 to vector<16x64xf32>
    %245 = arith.mulf %244, %243 : vector<16x64xf32>
    %246 = arith.addf %241, %245 : vector<16x64xf32>
    %cst_68 = arith.constant 0.797884583 : f32
    %247 = vector.broadcast %cst_68 : f32 to vector<16x64xf32>
    %248 = arith.mulf %247, %246 : vector<16x64xf32>
    %249 = math.tanh %248 : vector<16x64xf32>
    %cst_69 = arith.constant 1.000000e+00 : f32
    %250 = vector.broadcast %cst_69 : f32 to vector<16x64xf32>
    %251 = arith.addf %250, %249 : vector<16x64xf32>
    %cst_70 = arith.constant 5.000000e-01 : f32
    %252 = vector.broadcast %cst_70 : f32 to vector<16x64xf32>
    %253 = arith.mulf %252, %251 : vector<16x64xf32>
    %254 = arith.mulf %241, %253 : vector<16x64xf32>
    %255 = arith.truncf %254 : vector<16x64xf32> to vector<16x64xbf16>
    %cst_71 = arith.constant dense<0.000000e+00> : vector<16x32xf32>
    %256 = tpu.matmul %255, %142, %cst_71 {dimension_numbers = #tpu.dot_dimension_numbers<[1], [0], [0], [1], [0, 0, 1, 1], [], []>} : vector<16x64xbf16>, vector<64x32xbf16>, vector<16x32xf32> -> vector<16x32xf32>
    %257 = vector.broadcast %137 : vector<1x32xf32> to vector<16x32xf32>
    %258 = arith.addf %256, %257 : vector<16x32xf32>
    %259 = arith.addf %215, %258 : vector<16x32xf32>
    %c16 = arith.constant 16 : index
    %c0_72 = arith.constant 0 : index
    %260 = vector.load %arg3[%c16, %c0_72] : memref<24x128xf32, #tpu.memory_space<vmem>>, vector<1x32xf32>
    %c17 = arith.constant 17 : index
    %c0_73 = arith.constant 0 : index
    %261 = vector.load %arg3[%c17, %c0_73] : memref<24x128xf32, #tpu.memory_space<vmem>>, vector<1x32xf32>
    %cst_74 = arith.constant dense<0.000000e+00> : vector<16xf32>
    %262 = vector.multi_reduction <add>, %259, %cst_74 [1] : vector<16x32xf32> to vector<16xf32>
    %263 = vector.shape_cast %262 : vector<16xf32> to vector<16x1xf32>
    %cst_75 = arith.constant 3.200000e+01 : f32
    %264 = vector.broadcast %cst_75 : f32 to vector<16x1xf32>
    %265 = arith.divf %263, %264 : vector<16x1xf32>
    %266 = vector.broadcast %265 : vector<16x1xf32> to vector<16x32xf32>
    %267 = arith.subf %259, %266 : vector<16x32xf32>
    %268 = arith.mulf %267, %267 : vector<16x32xf32>
    %cst_76 = arith.constant dense<0.000000e+00> : vector<16xf32>
    %269 = vector.multi_reduction <add>, %268, %cst_76 [1] : vector<16x32xf32> to vector<16xf32>
    %270 = vector.shape_cast %269 : vector<16xf32> to vector<16x1xf32>
    %cst_77 = arith.constant 3.200000e+01 : f32
    %271 = vector.broadcast %cst_77 : f32 to vector<16x1xf32>
    %272 = arith.divf %270, %271 : vector<16x1xf32>
    %273 = vector.broadcast %265 : vector<16x1xf32> to vector<16x32xf32>
    %274 = arith.subf %259, %273 : vector<16x32xf32>
    %cst_78 = arith.constant 9.99999974E-6 : f32
    %275 = vector.broadcast %cst_78 : f32 to vector<16x1xf32>
    %276 = arith.addf %272, %275 : vector<16x1xf32>
    %277 = math.rsqrt %276 : vector<16x1xf32>
    %278 = vector.broadcast %277 : vector<16x1xf32> to vector<16x32xf32>
    %279 = arith.mulf %274, %278 : vector<16x32xf32>
    %280 = vector.broadcast %260 : vector<1x32xf32> to vector<16x32xf32>
    %281 = arith.mulf %279, %280 : vector<16x32xf32>
    %282 = vector.broadcast %261 : vector<1x32xf32> to vector<16x32xf32>
    %283 = arith.addf %281, %282 : vector<16x32xf32>
    %284 = vector.shape_cast %283 : vector<16x32xf32> to vector<2x8x32xf32>
    %c0_79 = arith.constant 0 : index
    %c0_80 = arith.constant 0 : index
    %c0_81 = arith.constant 0 : index
    %285 = vector.load %arg4[%c0_79, %c0_80, %c0_81] : memref<2x8x32xf32, #tpu.memory_space<vmem>>, vector<2x8x32xf32>
    tpu.vector_store %arg4[%c0_79, %c0_80, %c0_81], %284 {strides = array<i32>} : memref<2x8x32xf32, #tpu.memory_space<vmem>>, vector<2x8x32xf32>,
    return
  }
  func.func @transform_0(%arg0: i32) -> (i32, i32, i32) {
    %c0_i32 = arith.constant 0 : i32
    %c0_i32_0 = arith.constant 0 : i32
    %c0_i32_1 = arith.constant 0 : i32
    %c0_i32_2 = arith.constant 0 : i32
    return %c0_i32, %c0_i32_0, %c0_i32_1 : i32, i32, i32
  }
  func.func @transform_1(%arg0: i32) -> (i32, i32, i32) {
    %c0_i32 = arith.constant 0 : i32
    %c0_i32_0 = arith.constant 0 : i32
    %c0_i32_1 = arith.constant 0 : i32
    %c0_i32_2 = arith.constant 0 : i32
    return %c0_i32, %c0_i32_0, %c0_i32_1 : i32, i32, i32
  }
  func.func @transform_2(%arg0: i32) -> (i32, i32) {
    %c0_i32 = arith.constant 0 : i32
    %c0_i32_0 = arith.constant 0 : i32
    %c0_i32_1 = arith.constant 0 : i32
    return %c0_i32, %c0_i32_0 : i32, i32
  }
  func.func @transform_3(%arg0: i32) -> (i32, i32, i32) {
    %c0_i32 = arith.constant 0 : i32
    %c0_i32_0 = arith.constant 0 : i32
    %c0_i32_1 = arith.constant 0 : i32
    %c0_i32_2 = arith.constant 0 : i32
    return %c0_i32, %c0_i32_0, %c0_i32_1 : i32, i32, i32
  }
}

</mosaic_0001>

<llo_original>
// kernel: tpu_custom_call.1
$region0: #{tpu_custom_call.1}
  #allocation0 [shape = 'u32[]', space=smem, size = 0x4, offset = 0x4, fixed_abs, tag = 'smem constant byte address 0x4 - core index']
  #allocation1 [shape = 'u32[144,128]{1,0:T(1,128)}', space=vmem, size = 0x12000, scoped, tag = 'internal scratch']
  %s0 = inlined_call_operand.hbm [shape: f32[2,8,32], index: 0, kind: input, shape index: {}]
  %s1 = inlined_call_operand.hbm [shape: bf16[2,128,128], index: 1, kind: input, shape index: {}]
  %s2 = inlined_call_operand.hbm [shape: f32[24,128], index: 2, kind: input, shape index: {}]
  %s3 = inlined_call_operand.hbm [shape: f32[2,8,32], index: 3, kind: output, shape index: {}]
  %s4 = sld [smem:[#allocation0]]
  $region34: #{tpu_custom_call.1} parent=0
    _
  %s6 = ssub.s32 1, %s4
  %s7 = scalar_select 0, %s6, %s4
  $region1: #{tpu_custom_call.1} parent=0
    #allocation2 [shape = 'u8[8192]{0}', space=vmem, size = 0x2000, scoped, tag = 'input window, operand 0, single buffered']
    #allocation3 [shape = 's32[1]{0}', space=sflag, size = 0x4, scoped, tag = 'scoped memory for tpu_custom_call.1']
    #allocation4 [shape = 's32[1]{0}', space=sflag, size = 0x4, scoped, tag = 'scoped memory for tpu_custom_call.1']
    #allocation5 [shape = 'u8[65536]{0}', space=vmem, size = 0x10000, scoped, tag = 'input window, operand 1, single buffered']
    #allocation6 [shape = 's32[1]{0}', space=sflag, size = 0x4, scoped, tag = 'scoped memory for tpu_custom_call.1']
    #allocation7 [shape = 'u8[12288]{0}', space=vmem, size = 0x3000, scoped, tag = 'input window, operand 2, single buffered']
    #allocation8 [shape = 'u8[8192]{0}', space=vmem, size = 0x2000, scoped, tag = 'output window, operand 0, single buffered']
    %8 = vsyncpa [#allocation3], 0
    %9 = vsyncpa [#allocation6], 0
    %10 = vsyncpa [#allocation4], 0
    // Predicated region
    $region2: #{tpu_custom_call.1} parent=1 // pred_check
      _
    $region3: #{tpu_custom_call.1} parent=1 // pred_check_branch
      %12 = sbr.rel (0) target = $region5
    $region4: #{tpu_custom_call.1} parent=1 // pred_region
      %s14 = ssub.s32 256, 256
      %15 = vsyncadd [#allocation3], %s14
      %s16 = sshll.u32 [#allocation2], 4
      %s17 = int_to_ptr.vmem [resolvable:$true] %s16
      %22 = dma.hbm_to_vmem [thread:$0]  %s0, 256, %s17, [#allocation3], 128, 128, 8
    $region5: #{tpu_custom_call.1} parent=1 // pred_fallthru
      _
    // Predicated region
    $region6: #{tpu_custom_call.1} parent=1 // pred_check
      _
    $region7: #{tpu_custom_call.1} parent=1 // pred_check_branch
      %24 = sbr.rel (0) target = $region9
    $region8: #{tpu_custom_call.1} parent=1 // pred_region
      %s26 = ssub.s32 2048, 2048
      %27 = vsyncadd [#allocation6], %s26
      %s28 = sshll.u32 [#allocation5], 4
      %s29 = int_to_ptr.vmem [resolvable:$true] %s28
      %34 = dma.hbm_to_vmem [thread:$0]  %s1, 2048, %s29, [#allocation6], 64, 64, 4
    $region9: #{tpu_custom_call.1} parent=1 // pred_fallthru
      _
    // Predicated region
    $region10: #{tpu_custom_call.1} parent=1 // pred_check
      _
    $region11: #{tpu_custom_call.1} parent=1 // pred_check_branch
      %36 = sbr.rel (0) target = $region13
    $region12: #{tpu_custom_call.1} parent=1 // pred_region
      %s38 = ssub.s32 384, 384
      %39 = vsyncadd [#allocation6], %s38
      %s40 = sshll.u32 [#allocation7], 4
      %s41 = int_to_ptr.vmem [resolvable:$true] %s40
      %46 = dma.hbm_to_vmem [thread:$0]  %s2, 384, %s41, [#allocation6], 128, 128, 8
    $region13: #{tpu_custom_call.1} parent=1 // pred_fallthru
      _
    // Predicated region
    $region14: #{tpu_custom_call.1} parent=1 // pred_check
      _
    $region15: #{tpu_custom_call.1} parent=1 // pred_check_branch
      %48 = sbr.rel (0) target = $region17
    $region16: #{tpu_custom_call.1} parent=1 // pred_region
      %49 = dma.done [#allocation3], 256
    $region17: #{tpu_custom_call.1} parent=1 // pred_fallthru
      _
    // Predicated region
    $region18: #{tpu_custom_call.1} parent=1 // pred_check
      _
    $region19: #{tpu_custom_call.1} parent=1 // pred_check_branch
      %51 = sbr.rel (0) target = $region21
    $region20: #{tpu_custom_call.1} parent=1 // pred_region
      %52 = dma.done [#allocation6], 2048
    $region21: #{tpu_custom_call.1} parent=1 // pred_fallthru
      _
    // Predicated region
    $region22: #{tpu_custom_call.1} parent=1 // pred_check
      _
    $region23: #{tpu_custom_call.1} parent=1 // pred_check_branch
      %54 = sbr.rel (0) target = $region25
    $region24: #{tpu_custom_call.1} parent=1 // pred_region
      %55 = dma.done [#allocation6], 384
    $region25: #{tpu_custom_call.1} parent=1 // pred_fallthru
      _
    %v57 = vld [vmem:[#allocation2] sm:$0xff]
    %v58 = vld [vmem:[#allocation2 + $0x8] sm:$0xff]
    %v59 = vld [vmem:[#allocation7] sm:$0x1]
    %v60 = vld [vmem:[#allocation7 + $0x1] sm:$0x1]
    %v61 = vld [vmem:[#allocation7 + $0x2] sm:$0x1]
    %v62 = vld [vmem:[#allocation7 + $0x3] sm:$0x1]
    %v63 = vld [vmem:[#allocation7 + $0x4] sm:$0x1]
    %v64 = vld [vmem:[#allocation7 + $0x5] sm:$0x1]
    %v65 = vld [vmem:[#allocation7 + $0x6] sm:$0x1]
    %v66 = vld [vmem:[#allocation5] sm:$0xf]
    %v67 = vld [vmem:[#allocation5 + $0x4] sm:$0xf]
    %v68 = vld [vmem:[#allocation5 + $0x8] sm:$0xf]
    %v69 = vld [vmem:[#allocation5 + $0xc] sm:$0xf]
    %v70 = vld [vmem:[#allocation5 + $0x10] sm:$0xf]
    %v71 = vld [vmem:[#allocation5 + $0x14] sm:$0xf]
    %v72 = vld [vmem:[#allocation5 + $0x18] sm:$0xf]
    %v73 = vld [vmem:[#allocation5 + $0x1c] sm:$0xf]
    %v74 = vld [vmem:[#allocation5 + $0x20] sm:$0xf]
    %v75 = vld [vmem:[#allocation5 + $0x24] sm:$0xf]
    %v76 = vld [vmem:[#allocation5 + $0x28] sm:$0xf]
    %v77 = vld [vmem:[#allocation5 + $0x2c] sm:$0xf]
    %v78 = vld [vmem:[#allocation5 + $0x30] sm:$0xf]
    %v79 = vld [vmem:[#allocation5 + $0x34] sm:$0xf]
    %v80 = vld [vmem:[#allocation5 + $0x38] sm:$0xf]
    %v81 = vld [vmem:[#allocation5 + $0x3c] sm:$0xf]
    %vm82 = vcmask 261120
    %v83 = vsel %vm82, %v57, 0.0
    %84 = vadd.xlane.f32.xlu0 %v83
    %v85 = vpop.xlane.xlu0 %84
    %v86 = vsel %vm82, %v58, 0.0
    %87 = vadd.xlane.f32.xlu0 %v86
    %v88 = vpop.xlane.xlu0 %87
    %v89 = vrcp.pop 32.0
    %v90 = vmul.f32 %v85, %v89
    %v91 = vmul.f32 %v88, %v89
    %v92 = vsub.f32 %v57, %v90
    %v93 = vsub.f32 %v58, %v91
    %v94 = vmul.f32 %v92, %v92
    %v95 = vmul.f32 %v93, %v93
    %v96 = vsel %vm82, %v94, 0.0
    %97 = vadd.xlane.f32.xlu0 %v96
    %v98 = vpop.xlane.xlu0 %97
    %v99 = vsel %vm82, %v95, 0.0
    %100 = vadd.xlane.f32.xlu0 %v99
    %v101 = vpop.xlane.xlu0 %100
    %v102 = vmul.f32 %v98, %v89
    %v103 = vmul.f32 %v101, %v89
    %v104 = vadd.f32 %v102, 1e-05
    %v105 = vadd.f32 %v103, 1e-05
    %v106 = vrsqrt.pop %v104
    %v107 = vrsqrt.pop %v105
    %v108 = vmul.f32 %v92, %v106
    %v109 = vmul.f32 %v93, %v107
    %v110 = vlaneseq
    %v111 = vshrl.u32 %v110, 7
    %v112 = vsub.s32 0, %v111
    %v113 = vrot.slane %v59, %v112
    %v114 = vmul.f32 %v108, %v113
    %v115 = vmul.f32 %v109, %v113
    %v116 = vlaneseq
    %v117 = vshrl.u32 %v116, 7
    %v118 = vsub.s32 0, %v117
    %v119 = vrot.slane %v60, %v118
    %v120 = vadd.f32 %v114, %v119
    %v121 = vadd.f32 %v115, %v119
    %v122 = vpack.c.bf16 %v121, %v120
    %v127 = vunpack.c.l.b16 %v66
    %v128 = vunpack.c.l.b16 %v67
    %v129 = vunpack.c.l.b16 %v68
    %v130 = vunpack.c.l.b16 %v69
    %v131 = vpack.c.b16 %v128, %v127
    %v132 = vpack.c.b16 %v130, %v129
    %v136 = vsel %vm82, %v122, 0
    %138 = vmatprep.subr.bf16.mxu0 0
    %139 = vmatpush1.bf16.msra.mxu0 %v131
    %140 = vmatprep.subr.bf16.mxu0 0
    %141 = vmatpush1.bf16.msra.mxu0 %v132
    %142 = vmatprep.subr.bf16.mxu0 0
    %143 = vmatpush1.bf16.msra.mxu0 0
    %144 = vmatprep.subr.bf16.mxu0 0
    %145 = vmatpush1.bf16.msra.mxu0 0
    %146 = vmatprep.subr.bf16.mxu0 0
    %147 = vmatpush1.bf16.msra.mxu0 0
    %148 = vmatprep.subr.bf16.mxu0 0
    %149 = vmatpush1.bf16.msra.mxu0 0
    %150 = vmatprep.subr.bf16.mxu0 0
    %151 = vmatpush1.bf16.msra.mxu0 0
    %152 = vmatprep.subr.bf16.mxu0 0
    %153 = vmatpush1.bf16.msra.mxu0 0
    %154 = vmatprep.subr.bf16.mxu0 0
    %155 = vmatpush1.bf16.msra.mxu0 0
    %156 = vmatprep.subr.bf16.mxu0 0
    %157 = vmatpush1.bf16.msra.mxu0 0
    %158 = vmatprep.subr.bf16.mxu0 0
    %159 = vmatpush1.bf16.msra.mxu0 0
    %160 = vmatprep.subr.bf16.mxu0 0
    %161 = vmatpush1.bf16.msra.mxu0 0
    %162 = vmatprep.subr.bf16.mxu0 0
    %163 = vmatpush1.bf16.msra.mxu0 0
    %164 = vmatprep.subr.bf16.mxu0 0
    %165 = vmatpush1.bf16.msra.mxu0 0
    %166 = vmatprep.subr.bf16.mxu0 0
    %167 = vmatpush1.bf16.msra.mxu0 0
    %168 = vmatprep.subr.bf16.mxu0 0
    %169 = vmatpush1.bf16.msra.mxu0 0
    %170 = vmatprep.mubr.bf16.mxu0 0
    %171 = vmatmul.mubr.bf16.gmra.mrb[0].mxu0 %v136
    %v172 = vpop.f32.mrb[0].mxu0
    %v173 = vadd.f32 0.0, %v172
    %v174 = vpop.f32.mrb[0].mxu0
    %v175 = vpop.f32.mrb[0].mxu0
    %v176 = vadd.f32 0.0, %v175
    %v177 = vpop.f32.mrb[0].mxu0
    %178 = vdwg.mxu0
    %v179 = vpack.c.bf16 %v173, %v173
    %v180 = vpack.c.bf16 %v176, %v176
    %182 = vrot.lane.b32.xlu0 %v179, 96
    %v183 = vpop.permute.xlu0 %182
    %vm184 = vcmask 130048
    %v186 = vsel %vm184, %v179, 0
    %v189 = vsel %vm184, %v183, 0
    %191 = vmatprep.subr.bf16.mxu0 0
    %192 = vmatpush1.bf16.xpose.msra.mxu0 %v189
    %193 = vmatprep.subr.bf16.mxu0 0
    %194 = vmatpush1.bf16.xpose.msra.mxu0 0
    %195 = vmatprep.subr.bf16.mxu0 0
    %196 = vmatpush1.bf16.xpose.msra.mxu0 0
    %197 = vmatprep.subr.bf16.mxu0 0
    %198 = vmatpush1.bf16.xpose.msra.mxu0 0
    %199 = vmatprep.subr.bf16.mxu0 0
    %200 = vmatpush1.bf16.xpose.msra.mxu0 0
    %201 = vmatprep.subr.bf16.mxu0 0
    %202 = vmatpush1.bf16.xpose.msra.mxu0 0
    %203 = vmatprep.subr.bf16.mxu0 0
    %204 = vmatpush1.bf16.xpose.msra.mxu0 0
    %205 = vmatprep.subr.bf16.mxu0 0
    %206 = vmatpush1.bf16.xpose.msra.mxu0 0
    %207 = vmatprep.subr.bf16.mxu0 0
    %208 = vmatpush1.bf16.xpose.msra.mxu0 0
    %209 = vmatprep.subr.bf16.mxu0 0
    %210 = vmatpush1.bf16.xpose.msra.mxu0 0
    %211 = vmatprep.subr.bf16.mxu0 0
    %212 = vmatpush1.bf16.xpose.msra.mxu0 0
    %213 = vmatprep.subr.bf16.mxu0 0
    %214 = vmatpush1.bf16.xpose.msra.mxu0 0
    %215 = vmatprep.subr.bf16.mxu0 0
    %216 = vmatpush1.bf16.xpose.msra.mxu0 0
    %217 = vmatprep.subr.bf16.mxu0 0
    %218 = vmatpush1.bf16.xpose.msra.mxu0 0
    %219 = vmatprep.subr.bf16.mxu0 0
    %220 = vmatpush1.bf16.xpose.msra.mxu0 0
    %221 = vmatprep.subr.bf16.mxu0 0
    %222 = vmatpush1.bf16.xpose.msra.mxu0 0
    %223 = vmatprep.mubr.bf16.mxu0 0
    %224 = vmatmul.mubr.bf16.gmra.mrb[0].mxu0 %v186
    %v225 = vpop.f32.mrb[0].mxu0
    %v226 = vadd.f32 0.0, %v225
    %v227 = vpop.f32.mrb[0].mxu0
    %v228 = vpop.f32.mrb[0].mxu0
    %v229 = vpop.f32.mrb[0].mxu0
    %230 = vdwg.mxu0
    %232 = vrot.lane.b32.xlu0 %v180, 96
    %v233 = vpop.permute.xlu0 %232
    %v235 = vsel %vm184, %v180, 0
    %v238 = vsel %vm184, %v233, 0
    %240 = vmatprep.subr.bf16.mxu0 0
    %241 = vmatpush1.bf16.xpose.msra.mxu0 %v238
    %242 = vmatprep.subr.bf16.mxu0 0
    %243 = vmatpush1.bf16.xpose.msra.mxu0 0
    %244 = vmatprep.subr.bf16.mxu0 0
    %245 = vmatpush1.bf16.xpose.msra.mxu0 0
    %246 = vmatprep.subr.bf16.mxu0 0
    %247 = vmatpush1.bf16.xpose.msra.mxu0 0
    %248 = vmatprep.subr.bf16.mxu0 0
    %249 = vmatpush1.bf16.xpose.msra.mxu0 0
    %250 = vmatprep.subr.bf16.mxu0 0
    %251 = vmatpush1.bf16.xpose.msra.mxu0 0
    %252 = vmatprep.subr.bf16.mxu0 0
    %253 = vmatpush1.bf16.xpose.msra.mxu0 0
    %254 = vmatprep.subr.bf16.mxu0 0
    %255 = vmatpush1.bf16.xpose.msra.mxu0 0
    %256 = vmatprep.subr.bf16.mxu0 0
    %257 = vmatpush1.bf16.xpose.msra.mxu0 0
    %258 = vmatprep.subr.bf16.mxu0 0
    %259 = vmatpush1.bf16.xpose.msra.mxu0 0
    %260 = vmatprep.subr.bf16.mxu0 0
    %261 = vmatpush1.bf16.xpose.msra.mxu0 0
    %262 = vmatprep.subr.bf16.mxu0 0
    %263 = vmatpush1.bf16.xpose.msra.mxu0 0
    %264 = vmatprep.subr.bf16.mxu0 0
    %265 = vmatpush1.bf16.xpose.msra.mxu0 0
    %266 = vmatprep.subr.bf16.mxu0 0
    %267 = vmatpush1.bf16.xpose.msra.mxu0 0
    %268 = vmatprep.subr.bf16.mxu0 0
    %269 = vmatpush1.bf16.xpose.msra.mxu0 0
    %270 = vmatprep.subr.bf16.mxu0 0
    %271 = vmatpush1.bf16.xpose.msra.mxu0 0
    %272 = vmatprep.mubr.bf16.mxu0 0
    %273 = vmatmul.mubr.bf16.gmra.mrb[0].mxu0 %v235
    %v274 = vpop.f32.mrb[0].mxu0
    %v275 = vadd.f32 0.0, %v274
    %v276 = vpop.f32.mrb[0].mxu0
    %v277 = vpop.f32.mrb[0].mxu0
    %v278 = vpop.f32.mrb[0].mxu0
    %279 = vdwg.mxu0
    %vm280 = vcmask 64512
    %v281 = vsel %vm280, %v226, -inf
    %282 = vmax.xlane.f32.xlu0 %v281
    %v283 = vpop.xlane.xlu0 %282
    %v284 = vsel %vm280, %v275, -inf
    %285 = vmax.xlane.f32.xlu0 %v284
    %v286 = vpop.xlane.xlu0 %285
    %v287 = vsub.f32 %v226, %v283
    %v288 = vsub.f32 %v275, %v286
    %v289 = vmul.f32 %v287, 1.442695
    %v290 = vpow.pop %v289
    %v291 = vmul.f32 %v288, 1.442695
    %v292 = vpow.pop %v291
    %v293 = vsel %vm280, %v290, 0.0
    %294 = vadd.xlane.f32.xlu0 %v293
    %v295 = vpop.xlane.xlu0 %294
    %v296 = vsel %vm280, %v292, 0.0
    %297 = vadd.xlane.f32.xlu0 %v296
    %v298 = vpop.xlane.xlu0 %297
    %v299 = vrcp.pop %v295
    %v300 = vrcp.pop %v298
    %v301 = vmul.f32 %v290, %v299
    %v302 = vmul.f32 %v292, %v300
    %v303 = vpack.c.bf16 %v301, %v301
    %v304 = vpack.c.bf16 %v302, %v302
    %305 = vrot.lane.b32.xlu0 %v179, 112
    %v306 = vpop.permute.xlu0 %305
    %307 = vrot.lane.b32.xlu0 %v179, 80
    %v308 = vpop.permute.xlu0 %307
    %v310 = vsel %vm184, %v306, 0
    %v313 = vsel %vm184, %v308, 0
    %315 = vmatprep.subr.bf16.mxu0 0
    %316 = vmatpush1.bf16.xpose.msra.mxu0 %v313
    %317 = vmatprep.subr.bf16.mxu0 0
    %318 = vmatpush1.bf16.xpose.msra.mxu0 0
    %319 = vmatprep.subr.bf16.mxu0 0
    %320 = vmatpush1.bf16.xpose.msra.mxu0 0
    %321 = vmatprep.subr.bf16.mxu0 0
    %322 = vmatpush1.bf16.xpose.msra.mxu0 0
    %323 = vmatprep.subr.bf16.mxu0 0
    %324 = vmatpush1.bf16.xpose.msra.mxu0 0
    %325 = vmatprep.subr.bf16.mxu0 0
    %326 = vmatpush1.bf16.xpose.msra.mxu0 0
    %327 = vmatprep.subr.bf16.mxu0 0
    %328 = vmatpush1.bf16.xpose.msra.mxu0 0
    %329 = vmatprep.subr.bf16.mxu0 0
    %330 = vmatpush1.bf16.xpose.msra.mxu0 0
    %331 = vmatprep.subr.bf16.mxu0 0
    %332 = vmatpush1.bf16.xpose.msra.mxu0 0
    %333 = vmatprep.subr.bf16.mxu0 0
    %334 = vmatpush1.bf16.xpose.msra.mxu0 0
    %335 = vmatprep.subr.bf16.mxu0 0
    %336 = vmatpush1.bf16.xpose.msra.mxu0 0
    %337 = vmatprep.subr.bf16.mxu0 0
    %338 = vmatpush1.bf16.xpose.msra.mxu0 0
    %339 = vmatprep.subr.bf16.mxu0 0
    %340 = vmatpush1.bf16.xpose.msra.mxu0 0
    %341 = vmatprep.subr.bf16.mxu0 0
    %342 = vmatpush1.bf16.xpose.msra.mxu0 0
    %343 = vmatprep.subr.bf16.mxu0 0
    %344 = vmatpush1.bf16.xpose.msra.mxu0 0
    %345 = vmatprep.subr.bf16.mxu0 0
    %346 = vmatpush1.bf16.xpose.msra.mxu0 0
    %347 = vmatprep.mubr.bf16.mxu0 0
    %348 = vmatmul.mubr.bf16.gmra.mrb[0].mxu0 %v310
    %v349 = vpop.f32.mrb[0].mxu0
    %v350 = vadd.f32 0.0, %v349
    %v351 = vpop.f32.mrb[0].mxu0
    %v352 = vpop.f32.mrb[0].mxu0
    %v353 = vpop.f32.mrb[0].mxu0
    %354 = vdwg.mxu0
    %355 = vrot.lane.b32.xlu0 %v180, 112
    %v356 = vpop.permute.xlu0 %355
    %357 = vrot.lane.b32.xlu0 %v180, 80
    %v358 = vpop.permute.xlu0 %357
    %v360 = vsel %vm184, %v356, 0
    %v363 = vsel %vm184, %v358, 0
    %365 = vmatprep.subr.bf16.mxu0 0
    %366 = vmatpush1.bf16.xpose.msra.mxu0 %v363
    %367 = vmatprep.subr.bf16.mxu0 0
    %368 = vmatpush1.bf16.xpose.msra.mxu0 0
    %369 = vmatprep.subr.bf16.mxu0 0
    %370 = vmatpush1.bf16.xpose.msra.mxu0 0
    %371 = vmatprep.subr.bf16.mxu0 0
    %372 = vmatpush1.bf16.xpose.msra.mxu0 0
    %373 = vmatprep.subr.bf16.mxu0 0
    %374 = vmatpush1.bf16.xpose.msra.mxu0 0
    %375 = vmatprep.subr.bf16.mxu0 0
    %376 = vmatpush1.bf16.xpose.msra.mxu0 0
    %377 = vmatprep.subr.bf16.mxu0 0
    %378 = vmatpush1.bf16.xpose.msra.mxu0 0
    %379 = vmatprep.subr.bf16.mxu0 0
    %380 = vmatpush1.bf16.xpose.msra.mxu0 0
    %381 = vmatprep.subr.bf16.mxu0 0
    %382 = vmatpush1.bf16.xpose.msra.mxu0 0
    %383 = vmatprep.subr.bf16.mxu0 0
    %384 = vmatpush1.bf16.xpose.msra.mxu0 0
    %385 = vmatprep.subr.bf16.mxu0 0
    %386 = vmatpush1.bf16.xpose.msra.mxu0 0
    %387 = vmatprep.subr.bf16.mxu0 0
    %388 = vmatpush1.bf16.xpose.msra.mxu0 0
    %389 = vmatprep.subr.bf16.mxu0 0
    %390 = vmatpush1.bf16.xpose.msra.mxu0 0
    %391 = vmatprep.subr.bf16.mxu0 0
    %392 = vmatpush1.bf16.xpose.msra.mxu0 0
    %393 = vmatprep.subr.bf16.mxu0 0
    %394 = vmatpush1.bf16.xpose.msra.mxu0 0
    %395 = vmatprep.subr.bf16.mxu0 0
    %396 = vmatpush1.bf16.xpose.msra.mxu0 0
    %397 = vmatprep.mubr.bf16.mxu0 0
    %398 = vmatmul.mubr.bf16.gmra.mrb[0].mxu0 %v360
    %v399 = vpop.f32.mrb[0].mxu0
    %v400 = vadd.f32 0.0, %v399
    %v401 = vpop.f32.mrb[0].mxu0
    %v402 = vpop.f32.mrb[0].mxu0
    %v403 = vpop.f32.mrb[0].mxu0
    %404 = vdwg.mxu0
    %v405 = vsel %vm280, %v350, -inf
    %406 = vmax.xlane.f32.xlu0 %v405
    %v407 = vpop.xlane.xlu0 %406
    %v408 = vsel %vm280, %v400, -inf
    %409 = vmax.xlane.f32.xlu0 %v408
    %v410 = vpop.xlane.xlu0 %409
    %v411 = vsub.f32 %v350, %v407
    %v412 = vsub.f32 %v400, %v410
    %v413 = vmul.f32 %v411, 1.442695
    %v414 = vpow.pop %v413
    %v415 = vmul.f32 %v412, 1.442695
    %v416 = vpow.pop %v415
    %v417 = vsel %vm280, %v414, 0.0
    %418 = vadd.xlane.f32.xlu0 %v417
    %v419 = vpop.xlane.xlu0 %418
    %v420 = vsel %vm280, %v416, 0.0
    %421 = vadd.xlane.f32.xlu0 %v420
    %v422 = vpop.xlane.xlu0 %421
    %v423 = vrcp.pop %v419
    %v424 = vrcp.pop %v422
    %v425 = vmul.f32 %v414, %v423
    %v426 = vmul.f32 %v416, %v424
    %v427 = vpack.c.bf16 %v425, %v425
    %v428 = vpack.c.bf16 %v426, %v426
    %429 = vrot.lane.b32.xlu0 %v179, 32
    %v430 = vpop.permute.xlu0 %429
    %v432 = vsel %vm280, %v427, 0
    %vm434 = vcmask 1043456
    %v436 = vsel %vm434, %v430, 0
    %438 = vmatprep.subr.bf16.mxu0 0
    %439 = vmatpush1.bf16.msra.mxu0 %v436
    %440 = vmatprep.subr.bf16.mxu0 0
    %441 = vmatpush1.bf16.msra.mxu0 0
    %442 = vmatprep.subr.bf16.mxu0 0
    %443 = vmatpush1.bf16.msra.mxu0 0
    %444 = vmatprep.subr.bf16.mxu0 0
    %445 = vmatpush1.bf16.msra.mxu0 0
    %446 = vmatprep.subr.bf16.mxu0 0
    %447 = vmatpush1.bf16.msra.mxu0 0
    %448 = vmatprep.subr.bf16.mxu0 0
    %449 = vmatpush1.bf16.msra.mxu0 0
    %450 = vmatprep.subr.bf16.mxu0 0
    %451 = vmatpush1.bf16.msra.mxu0 0
    %452 = vmatprep.subr.bf16.mxu0 0
    %453 = vmatpush1.bf16.msra.mxu0 0
    %454 = vmatprep.subr.bf16.mxu0 0
    %455 = vmatpush1.bf16.msra.mxu0 0
    %456 = vmatprep.subr.bf16.mxu0 0
    %457 = vmatpush1.bf16.msra.mxu0 0
    %458 = vmatprep.subr.bf16.mxu0 0
    %459 = vmatpush1.bf16.msra.mxu0 0
    %460 = vmatprep.subr.bf16.mxu0 0
    %461 = vmatpush1.bf16.msra.mxu0 0
    %462 = vmatprep.subr.bf16.mxu0 0
    %463 = vmatpush1.bf16.msra.mxu0 0
    %464 = vmatprep.subr.bf16.mxu0 0
    %465 = vmatpush1.bf16.msra.mxu0 0
    %466 = vmatprep.subr.bf16.mxu0 0
    %467 = vmatpush1.bf16.msra.mxu0 0
    %468 = vmatprep.subr.bf16.mxu0 0
    %469 = vmatpush1.bf16.msra.mxu0 0
    %470 = vmatprep.mubr.bf16.mxu0 0
    %471 = vmatmul.mubr.bf16.gmra.mrb[0].mxu0 %v432
    %v472 = vpop.f32.mrb[0].mxu0
    %v473 = vadd.f32 0.0, %v472
    %v474 = vpop.f32.mrb[0].mxu0
    %v475 = vpop.f32.mrb[0].mxu0
    %v476 = vpop.f32.mrb[0].mxu0
    %477 = vdwg.mxu0
    %478 = vrot.lane.b32.xlu0 %v180, 32
    %v479 = vpop.permute.xlu0 %478
    %v481 = vsel %vm280, %v428, 0
    %v484 = vsel %vm434, %v479, 0
    %486 = vmatprep.subr.bf16.mxu0 0
    %487 = vmatpush1.bf16.msra.mxu0 %v484
    %488 = vmatprep.subr.bf16.mxu0 0
    %489 = vmatpush1.bf16.msra.mxu0 0
    %490 = vmatprep.subr.bf16.mxu0 0
    %491 = vmatpush1.bf16.msra.mxu0 0
    %492 = vmatprep.subr.bf16.mxu0 0
    %493 = vmatpush1.bf16.msra.mxu0 0
    %494 = vmatprep.subr.bf16.mxu0 0
    %495 = vmatpush1.bf16.msra.mxu0 0
    %496 = vmatprep.subr.bf16.mxu0 0
    %497 = vmatpush1.bf16.msra.mxu0 0
    %498 = vmatprep.subr.bf16.mxu0 0
    %499 = vmatpush1.bf16.msra.mxu0 0
    %500 = vmatprep.subr.bf16.mxu0 0
    %501 = vmatpush1.bf16.msra.mxu0 0
    %502 = vmatprep.subr.bf16.mxu0 0
    %503 = vmatpush1.bf16.msra.mxu0 0
    %504 = vmatprep.subr.bf16.mxu0 0
    %505 = vmatpush1.bf16.msra.mxu0 0
    %506 = vmatprep.subr.bf16.mxu0 0
    %507 = vmatpush1.bf16.msra.mxu0 0
    %508 = vmatprep.subr.bf16.mxu0 0
    %509 = vmatpush1.bf16.msra.mxu0 0
    %510 = vmatprep.subr.bf16.mxu0 0
    %511 = vmatpush1.bf16.msra.mxu0 0
    %512 = vmatprep.subr.bf16.mxu0 0
    %513 = vmatpush1.bf16.msra.mxu0 0
    %514 = vmatprep.subr.bf16.mxu0 0
    %515 = vmatpush1.bf16.msra.mxu0 0
    %516 = vmatprep.subr.bf16.mxu0 0
    %517 = vmatpush1.bf16.msra.mxu0 0
    %518 = vmatprep.mubr.bf16.mxu0 0
    %519 = vmatmul.mubr.bf16.gmra.mrb[0].mxu0 %v481
    %v520 = vpop.f32.mrb[0].mxu0
    %v521 = vadd.f32 0.0, %v520
    %v522 = vpop.f32.mrb[0].mxu0
    %v523 = vpop.f32.mrb[0].mxu0
    %v524 = vpop.f32.mrb[0].mxu0
    %525 = vdwg.mxu0
    %526 = vrot.lane.b32.xlu0 %v179, 64
    %v527 = vpop.permute.xlu0 %526
    %v529 = vsel %vm280, %v303, 0
    %v532 = vsel %vm434, %v527, 0
    %534 = vmatprep.subr.bf16.mxu0 0
    %535 = vmatpush1.bf16.msra.mxu0 %v532
    %536 = vmatprep.subr.bf16.mxu0 0
    %537 = vmatpush1.bf16.msra.mxu0 0
    %538 = vmatprep.subr.bf16.mxu0 0
    %539 = vmatpush1.bf16.msra.mxu0 0
    %540 = vmatprep.subr.bf16.mxu0 0
    %541 = vmatpush1.bf16.msra.mxu0 0
    %542 = vmatprep.subr.bf16.mxu0 0
    %543 = vmatpush1.bf16.msra.mxu0 0
    %544 = vmatprep.subr.bf16.mxu0 0
    %545 = vmatpush1.bf16.msra.mxu0 0
    %546 = vmatprep.subr.bf16.mxu0 0
    %547 = vmatpush1.bf16.msra.mxu0 0
    %548 = vmatprep.subr.bf16.mxu0 0
    %549 = vmatpush1.bf16.msra.mxu0 0
    %550 = vmatprep.subr.bf16.mxu0 0
    %551 = vmatpush1.bf16.msra.mxu0 0
    %552 = vmatprep.subr.bf16.mxu0 0
    %553 = vmatpush1.bf16.msra.mxu0 0
    %554 = vmatprep.subr.bf16.mxu0 0
    %555 = vmatpush1.bf16.msra.mxu0 0
    %556 = vmatprep.subr.bf16.mxu0 0
    %557 = vmatpush1.bf16.msra.mxu0 0
    %558 = vmatprep.subr.bf16.mxu0 0
    %559 = vmatpush1.bf16.msra.mxu0 0
    %560 = vmatprep.subr.bf16.mxu0 0
    %561 = vmatpush1.bf16.msra.mxu0 0
    %562 = vmatprep.subr.bf16.mxu0 0
    %563 = vmatpush1.bf16.msra.mxu0 0
    %564 = vmatprep.subr.bf16.mxu0 0
    %565 = vmatpush1.bf16.msra.mxu0 0
    %566 = vmatprep.mubr.bf16.mxu0 0
    %567 = vmatmul.mubr.bf16.gmra.mrb[0].mxu0 %v529
    %v568 = vpop.f32.mrb[0].mxu0
    %v569 = vadd.f32 %v473, %v568
    %v570 = vpop.f32.mrb[0].mxu0
    %v571 = vpop.f32.mrb[0].mxu0
    %v572 = vpop.f32.mrb[0].mxu0
    %573 = vdwg.mxu0
    %574 = vrot.lane.b32.xlu0 %v180, 64
    %v575 = vpop.permute.xlu0 %574
    %v577 = vsel %vm280, %v304, 0
    %v580 = vsel %vm434, %v575, 0
    %582 = vmatprep.subr.bf16.mxu0 0
    %583 = vmatpush1.bf16.msra.mxu0 %v580
    %584 = vmatprep.subr.bf16.mxu0 0
    %585 = vmatpush1.bf16.msra.mxu0 0
    %586 = vmatprep.subr.bf16.mxu0 0
    %587 = vmatpush1.bf16.msra.mxu0 0
    %588 = vmatprep.subr.bf16.mxu0 0
    %589 = vmatpush1.bf16.msra.mxu0 0
    %590 = vmatprep.subr.bf16.mxu0 0
    %591 = vmatpush1.bf16.msra.mxu0 0
    %592 = vmatprep.subr.bf16.mxu0 0
    %593 = vmatpush1.bf16.msra.mxu0 0
    %594 = vmatprep.subr.bf16.mxu0 0
    %595 = vmatpush1.bf16.msra.mxu0 0
    %596 = vmatprep.subr.bf16.mxu0 0
    %597 = vmatpush1.bf16.msra.mxu0 0
    %598 = vmatprep.subr.bf16.mxu0 0
    %599 = vmatpush1.bf16.msra.mxu0 0
    %600 = vmatprep.subr.bf16.mxu0 0
    %601 = vmatpush1.bf16.msra.mxu0 0
    %602 = vmatprep.subr.bf16.mxu0 0
    %603 = vmatpush1.bf16.msra.mxu0 0
    %604 = vmatprep.subr.bf16.mxu0 0
    %605 = vmatpush1.bf16.msra.mxu0 0
    %606 = vmatprep.subr.bf16.mxu0 0
    %607 = vmatpush1.bf16.msra.mxu0 0
    %608 = vmatprep.subr.bf16.mxu0 0
    %609 = vmatpush1.bf16.msra.mxu0 0
    %610 = vmatprep.subr.bf16.mxu0 0
    %611 = vmatpush1.bf16.msra.mxu0 0
    %612 = vmatprep.subr.bf16.mxu0 0
    %613 = vmatpush1.bf16.msra.mxu0 0
    %614 = vmatprep.mubr.bf16.mxu0 0
    %615 = vmatmul.mubr.bf16.gmra.mrb[0].mxu0 %v577
    %v616 = vpop.f32.mrb[0].mxu0
    %v617 = vadd.f32 %v521, %v616
    %v618 = vpop.f32.mrb[0].mxu0
    %v619 = vpop.f32.mrb[0].mxu0
    %v620 = vpop.f32.mrb[0].mxu0
    %621 = vdwg.mxu0
    %v622 = vadd.f32 %v57, %v569
    %v623 = vadd.f32 %v58, %v617
    %v624 = vlaneseq
    %v625 = vshrl.u32 %v624, 7
    %v626 = vsub.s32 0, %v625
    %v627 = vrot.slane %v61, %v626
    %v628 = vadd.f32 %v622, %v627
    %v629 = vadd.f32 %v623, %v627
    %v630 = vsel %vm82, %v628, 0.0
    %631 = vadd.xlane.f32.xlu0 %v630
    %v632 = vpop.xlane.xlu0 %631
    %v633 = vsel %vm82, %v629, 0.0
    %634 = vadd.xlane.f32.xlu0 %v633
    %v635 = vpop.xlane.xlu0 %634
    %v636 = vmul.f32 %v632, %v89
    %v637 = vmul.f32 %v635, %v89
    %v638 = vsub.f32 %v628, %v636
    %v639 = vsub.f32 %v629, %v637
    %v640 = vmul.f32 %v638, %v638
    %v641 = vmul.f32 %v639, %v639
    %v642 = vsel %vm82, %v640, 0.0
    %643 = vadd.xlane.f32.xlu0 %v642
    %v644 = vpop.xlane.xlu0 %643
    %v645 = vsel %vm82, %v641, 0.0
    %646 = vadd.xlane.f32.xlu0 %v645
    %v647 = vpop.xlane.xlu0 %646
    %v648 = vmul.f32 %v644, %v89
    %v649 = vmul.f32 %v647, %v89
    %v650 = vadd.f32 %v648, 1e-05
    %v651 = vadd.f32 %v649, 1e-05
    %v652 = vrsqrt.pop %v650
    %v653 = vrsqrt.pop %v651
    %v654 = vmul.f32 %v638, %v652
    %v655 = vmul.f32 %v639, %v653
    %v656 = vlaneseq
    %v657 = vshrl.u32 %v656, 7
    %v658 = vsub.s32 0, %v657
    %v659 = vrot.slane %v62, %v658
    %v660 = vmul.f32 %v654, %v659
    %v661 = vmul.f32 %v655, %v659
    %v662 = vlaneseq
    %v663 = vshrl.u32 %v662, 7
    %v664 = vsub.s32 0, %v663
    %v665 = vrot.slane %v63, %v664
    %v666 = vadd.f32 %v660, %v665
    %v667 = vadd.f32 %v661, %v665
    %v668 = vpack.c.bf16 %v667, %v666
    %v669 = vlaneseq
    %v670 = vshrl.u32 %v669, 7
    %v671 = vsub.s32 0, %v670
    %v672 = vrot.slane %v64, %v671
    %v677 = vunpack.c.l.b16 %v70
    %v678 = vunpack.c.l.b16 %v71
    %v679 = vunpack.c.l.b16 %v72
    %v680 = vunpack.c.l.b16 %v73
    %v681 = vpack.c.b16 %v678, %v677
    %v682 = vpack.c.b16 %v680, %v679
    %v686 = vsel %vm82, %v668, 0
    %688 = vmatprep.subr.bf16.mxu0 0
    %689 = vmatpush1.bf16.msra.mxu0 %v681
    %690 = vmatprep.subr.bf16.mxu0 0
    %691 = vmatpush1.bf16.msra.mxu0 %v682
    %692 = vmatprep.subr.bf16.mxu0 0
    %693 = vmatpush1.bf16.msra.mxu0 0
    %694 = vmatprep.subr.bf16.mxu0 0
    %695 = vmatpush1.bf16.msra.mxu0 0
    %696 = vmatprep.subr.bf16.mxu0 0
    %697 = vmatpush1.bf16.msra.mxu0 0
    %698 = vmatprep.subr.bf16.mxu0 0
    %699 = vmatpush1.bf16.msra.mxu0 0
    %700 = vmatprep.subr.bf16.mxu0 0
    %701 = vmatpush1.bf16.msra.mxu0 0
    %702 = vmatprep.subr.bf16.mxu0 0
    %703 = vmatpush1.bf16.msra.mxu0 0
    %704 = vmatprep.subr.bf16.mxu0 0
    %705 = vmatpush1.bf16.msra.mxu0 0
    %706 = vmatprep.subr.bf16.mxu0 0
    %707 = vmatpush1.bf16.msra.mxu0 0
    %708 = vmatprep.subr.bf16.mxu0 0
    %709 = vmatpush1.bf16.msra.mxu0 0
    %710 = vmatprep.subr.bf16.mxu0 0
    %711 = vmatpush1.bf16.msra.mxu0 0
    %712 = vmatprep.subr.bf16.mxu0 0
    %713 = vmatpush1.bf16.msra.mxu0 0
    %714 = vmatprep.subr.bf16.mxu0 0
    %715 = vmatpush1.bf16.msra.mxu0 0
    %716 = vmatprep.subr.bf16.mxu0 0
    %717 = vmatpush1.bf16.msra.mxu0 0
    %718 = vmatprep.subr.bf16.mxu0 0
    %719 = vmatpush1.bf16.msra.mxu0 0
    %720 = vmatprep.mubr.bf16.mxu0 0
    %721 = vmatmul.mubr.bf16.gmra.mrb[0].mxu0 %v686
    %v722 = vpop.f32.mrb[0].mxu0
    %v723 = vadd.f32 %v672, %v722
    %v724 = vpop.f32.mrb[0].mxu0
    %v725 = vpop.f32.mrb[0].mxu0
    %v726 = vadd.f32 %v672, %v725
    %v727 = vpop.f32.mrb[0].mxu0
    %728 = vdwg.mxu0
    %v729 = vmul.f32 %v723, %v723
    %v730 = vmul.f32 %v726, %v726
    %v731 = vmul.f32 %v723, %v729
    %v732 = vmul.f32 %v726, %v730
    %v733 = vmul.f32 %v731, 0.044715
    %v734 = vmul.f32 %v732, 0.044715
    %v735 = vadd.f32 %v723, %v733
    %v736 = vadd.f32 %v726, %v734
    %v737 = vmul.f32 %v735, 0.7978846
    %v738 = vmul.f32 %v736, 0.7978846
    %v739 = vtanh.pop %v737
    %v740 = vtanh.pop %v738
    %v741 = vadd.f32 %v739, 1.0
    %v742 = vadd.f32 %v740, 1.0
    %v743 = vmul.f32 %v741, 0.5
    %v744 = vmul.f32 %v742, 0.5
    %v745 = vmul.f32 %v723, %v743
    %v746 = vmul.f32 %v726, %v744
    %v747 = vpack.c.bf16 %v746, %v745
    %v748 = vlaneseq
    %v749 = vshrl.u32 %v748, 7
    %v750 = vsub.s32 0, %v749
    %v751 = vrot.slane %v65, %v750
    %v760 = vunpack.c.l.b16 %v74
    %v761 = vunpack.c.l.b16 %v75
    %v762 = vunpack.c.l.b16 %v76
    %v763 = vunpack.c.l.b16 %v77
    %v764 = vunpack.c.l.b16 %v78
    %v765 = vunpack.c.l.b16 %v79
    %v766 = vunpack.c.l.b16 %v80
    %v767 = vunpack.c.l.b16 %v81
    %v768 = vpack.c.b16 %v761, %v760
    %v769 = vpack.c.b16 %v763, %v762
    %v770 = vpack.c.b16 %v765, %v764
    %v771 = vpack.c.b16 %v767, %v766
    %vm776 = vcmask 523264
    %v778 = vsel %vm776, %v747, 0
    %780 = vmatprep.subr.bf16.mxu0 0
    %781 = vmatpush1.bf16.msra.mxu0 %v768
    %782 = vmatprep.subr.bf16.mxu0 0
    %783 = vmatpush1.bf16.msra.mxu0 %v769
    %784 = vmatprep.subr.bf16.mxu0 0
    %785 = vmatpush1.bf16.msra.mxu0 %v770
    %786 = vmatprep.subr.bf16.mxu0 0
    %787 = vmatpush1.bf16.msra.mxu0 %v771
    %788 = vmatprep.subr.bf16.mxu0 0
    %789 = vmatpush1.bf16.msra.mxu0 0
    %790 = vmatprep.subr.bf16.mxu0 0
    %791 = vmatpush1.bf16.msra.mxu0 0
    %792 = vmatprep.subr.bf16.mxu0 0
    %793 = vmatpush1.bf16.msra.mxu0 0
    %794 = vmatprep.subr.bf16.mxu0 0
    %795 = vmatpush1.bf16.msra.mxu0 0
    %796 = vmatprep.subr.bf16.mxu0 0
    %797 = vmatpush1.bf16.msra.mxu0 0
    %798 = vmatprep.subr.bf16.mxu0 0
    %799 = vmatpush1.bf16.msra.mxu0 0
    %800 = vmatprep.subr.bf16.mxu0 0
    %801 = vmatpush1.bf16.msra.mxu0 0
    %802 = vmatprep.subr.bf16.mxu0 0
    %803 = vmatpush1.bf16.msra.mxu0 0
    %804 = vmatprep.subr.bf16.mxu0 0
    %805 = vmatpush1.bf16.msra.mxu0 0
    %806 = vmatprep.subr.bf16.mxu0 0
    %807 = vmatpush1.bf16.msra.mxu0 0
    %808 = vmatprep.subr.bf16.mxu0 0
    %809 = vmatpush1.bf16.msra.mxu0 0
    %810 = vmatprep.subr.bf16.mxu0 0
    %811 = vmatpush1.bf16.msra.mxu0 0
    %812 = vmatprep.mubr.bf16.mxu0 0
    %813 = vmatmul.mubr.bf16.gmra.mrb[0].mxu0 %v778
    %v814 = vpop.f32.mrb[0].mxu0
    %v815 = vadd.f32 %v751, %v814
    %v816 = vpop.f32.mrb[0].mxu0
    %v817 = vpop.f32.mrb[0].mxu0
    %v818 = vadd.f32 %v751, %v817
    %v819 = vpop.f32.mrb[0].mxu0
    %820 = vdwg.mxu0
    %v821 = vadd.f32 %v628, %v815
    %v822 = vadd.f32 %v629, %v818
    %v823 = vld [vmem:[#allocation7 + $0x8] sm:$0x1]
    %v824 = vld [vmem:[#allocation7 + $0x9] sm:$0x1]
    %v825 = vld [vmem:[#allocation7 + $0xa] sm:$0x1]
    %v826 = vld [vmem:[#allocation7 + $0xb] sm:$0x1]
    %v827 = vld [vmem:[#allocation7 + $0xc] sm:$0x1]
    %v828 = vld [vmem:[#allocation7 + $0xd] sm:$0x1]
    %v829 = vld [vmem:[#allocation7 + $0xe] sm:$0x1]
    %s830 = scalar_lea.vmem [#allocation5], 64
    %v831 = vld [vmem:[%s830] sm:$0xf]
    %v832 = vld [vmem:[%s830 + $0x4] sm:$0xf]
    %v833 = vld [vmem:[%s830 + $0x8] sm:$0xf]
    %v834 = vld [vmem:[%s830 + $0xc] sm:$0xf]
    %v835 = vld [vmem:[%s830 + $0x10] sm:$0xf]
    %v836 = vld [vmem:[%s830 + $0x14] sm:$0xf]
    %v837 = vld [vmem:[%s830 + $0x18] sm:$0xf]
    %v838 = vld [vmem:[%s830 + $0x1c] sm:$0xf]
    %v839 = vld [vmem:[%s830 + $0x20] sm:$0xf]
    %v840 = vld [vmem:[%s830 + $0x24] sm:$0xf]
    %v841 = vld [vmem:[%s830 + $0x28] sm:$0xf]
    %v842 = vld [vmem:[%s830 + $0x2c] sm:$0xf]
    %v843 = vld [vmem:[%s830 + $0x30] sm:$0xf]
    %v844 = vld [vmem:[%s830 + $0x34] sm:$0xf]
    %v845 = vld [vmem:[%s830 + $0x38] sm:$0xf]
    %v846 = vld [vmem:[%s830 + $0x3c] sm:$0xf]
    %v847 = vsel %vm82, %v821, 0.0
    %848 = vadd.xlane.f32.xlu0 %v847
    %v849 = vpop.xlane.xlu0 %848
    %v850 = vsel %vm82, %v822, 0.0
    %851 = vadd.xlane.f32.xlu0 %v850
    %v852 = vpop.xlane.xlu0 %851
    %v853 = vmul.f32 %v849, %v89
    %v854 = vmul.f32 %v852, %v89
    %v855 = vsub.f32 %v821, %v853
    %v856 = vsub.f32 %v822, %v854
    %v857 = vmul.f32 %v855, %v855
    %v858 = vmul.f32 %v856, %v856
    %v859 = vsel %vm82, %v857, 0.0
    %860 = vadd.xlane.f32.xlu0 %v859
    %v861 = vpop.xlane.xlu0 %860
    %v862 = vsel %vm82, %v858, 0.0
    %863 = vadd.xlane.f32.xlu0 %v862
    %v864 = vpop.xlane.xlu0 %863
    %v865 = vmul.f32 %v861, %v89
    %v866 = vmul.f32 %v864, %v89
    %v867 = vadd.f32 %v865, 1e-05
    %v868 = vadd.f32 %v866, 1e-05
    %v869 = vrsqrt.pop %v867
    %v870 = vrsqrt.pop %v868
    %v871 = vmul.f32 %v855, %v869
    %v872 = vmul.f32 %v856, %v870
    %v873 = vlaneseq
    %v874 = vshrl.u32 %v873, 7
    %v875 = vsub.s32 0, %v874
    %v876 = vrot.slane %v823, %v875
    %v877 = vmul.f32 %v871, %v876
    %v878 = vmul.f32 %v872, %v876
    %v879 = vlaneseq
    %v880 = vshrl.u32 %v879, 7
    %v881 = vsub.s32 0, %v880
    %v882 = vrot.slane %v824, %v881
    %v883 = vadd.f32 %v877, %v882
    %v884 = vadd.f32 %v878, %v882
    %v885 = vpack.c.bf16 %v884, %v883
    %v890 = vunpack.c.l.b16 %v831
    %v891 = vunpack.c.l.b16 %v832
    %v892 = vunpack.c.l.b16 %v833
    %v893 = vunpack.c.l.b16 %v834
    %v894 = vpack.c.b16 %v891, %v890
    %v895 = vpack.c.b16 %v893, %v892
    %v899 = vsel %vm82, %v885, 0
    %901 = vmatprep.subr.bf16.mxu0 0
    %902 = vmatpush1.bf16.msra.mxu0 %v894
    %903 = vmatprep.subr.bf16.mxu0 0
    %904 = vmatpush1.bf16.msra.mxu0 %v895
    %905 = vmatprep.subr.bf16.mxu0 0
    %906 = vmatpush1.bf16.msra.mxu0 0
    %907 = vmatprep.subr.bf16.mxu0 0
    %908 = vmatpush1.bf16.msra.mxu0 0
    %909 = vmatprep.subr.bf16.mxu0 0
    %910 = vmatpush1.bf16.msra.mxu0 0
    %911 = vmatprep.subr.bf16.mxu0 0
    %912 = vmatpush1.bf16.msra.mxu0 0
    %913 = vmatprep.subr.bf16.mxu0 0
    %914 = vmatpush1.bf16.msra.mxu0 0
    %915 = vmatprep.subr.bf16.mxu0 0
    %916 = vmatpush1.bf16.msra.mxu0 0
    %917 = vmatprep.subr.bf16.mxu0 0
    %918 = vmatpush1.bf16.msra.mxu0 0
    %919 = vmatprep.subr.bf16.mxu0 0
    %920 = vmatpush1.bf16.msra.mxu0 0
    %921 = vmatprep.subr.bf16.mxu0 0
    %922 = vmatpush1.bf16.msra.mxu0 0
    %923 = vmatprep.subr.bf16.mxu0 0
    %924 = vmatpush1.bf16.msra.mxu0 0
    %925 = vmatprep.subr.bf16.mxu0 0
    %926 = vmatpush1.bf16.msra.mxu0 0
    %927 = vmatprep.subr.bf16.mxu0 0
    %928 = vmatpush1.bf16.msra.mxu0 0
    %929 = vmatprep.subr.bf16.mxu0 0
    %930 = vmatpush1.bf16.msra.mxu0 0
    %931 = vmatprep.subr.bf16.mxu0 0
    %932 = vmatpush1.bf16.msra.mxu0 0
    %933 = vmatprep.mubr.bf16.mxu0 0
    %934 = vmatmul.mubr.bf16.gmra.mrb[0].mxu0 %v899
    %v935 = vpop.f32.mrb[0].mxu0
    %v936 = vadd.f32 0.0, %v935
    %v937 = vpop.f32.mrb[0].mxu0
    %v938 = vpop.f32.mrb[0].mxu0
    %v939 = vadd.f32 0.0, %v938
    %v940 = vpop.f32.mrb[0].mxu0
    %941 = vdwg.mxu0
    %v942 = vpack.c.bf16 %v936, %v936
    %v943 = vpack.c.bf16 %v939, %v939
    %945 = vrot.lane.b32.xlu0 %v942, 96
    %v946 = vpop.permute.xlu0 %945
    %v948 = vsel %vm184, %v942, 0
    %v951 = vsel %vm184, %v946, 0
    %953 = vmatprep.subr.bf16.mxu0 0
    %954 = vmatpush1.bf16.xpose.msra.mxu0 %v951
    %955 = vmatprep.subr.bf16.mxu0 0
    %956 = vmatpush1.bf16.xpose.msra.mxu0 0
    %957 = vmatprep.subr.bf16.mxu0 0
    %958 = vmatpush1.bf16.xpose.msra.mxu0 0
    %959 = vmatprep.subr.bf16.mxu0 0
    %960 = vmatpush1.bf16.xpose.msra.mxu0 0
    %961 = vmatprep.subr.bf16.mxu0 0
    %962 = vmatpush1.bf16.xpose.msra.mxu0 0
    %963 = vmatprep.subr.bf16.mxu0 0
    %964 = vmatpush1.bf16.xpose.msra.mxu0 0
    %965 = vmatprep.subr.bf16.mxu0 0
    %966 = vmatpush1.bf16.xpose.msra.mxu0 0
    %967 = vmatprep.subr.bf16.mxu0 0
    %968 = vmatpush1.bf16.xpose.msra.mxu0 0
    %969 = vmatprep.subr.bf16.mxu0 0
    %970 = vmatpush1.bf16.xpose.msra.mxu0 0
    %971 = vmatprep.subr.bf16.mxu0 0
    %972 = vmatpush1.bf16.xpose.msra.mxu0 0
    %973 = vmatprep.subr.bf16.mxu0 0
    %974 = vmatpush1.bf16.xpose.msra.mxu0 0
    %975 = vmatprep.subr.bf16.mxu0 0
    %976 = vmatpush1.bf16.xpose.msra.mxu0 0
    %977 = vmatprep.subr.bf16.mxu0 0
    %978 = vmatpush1.bf16.xpose.msra.mxu0 0
    %979 = vmatprep.subr.bf16.mxu0 0
    %980 = vmatpush1.bf16.xpose.msra.mxu0 0
    %981 = vmatprep.subr.bf16.mxu0 0
    %982 = vmatpush1.bf16.xpose.msra.mxu0 0
    %983 = vmatprep.subr.bf16.mxu0 0
    %984 = vmatpush1.bf16.xpose.msra.mxu0 0
    %985 = vmatprep.mubr.bf16.mxu0 0
    %986 = vmatmul.mubr.bf16.gmra.mrb[0].mxu0 %v948
    %v987 = vpop.f32.mrb[0].mxu0
    %v988 = vadd.f32 0.0, %v987
    %v989 = vpop.f32.mrb[0].mxu0
    %v990 = vpop.f32.mrb[0].mxu0
    %v991 = vpop.f32.mrb[0].mxu0
    %992 = vdwg.mxu0
    %994 = vrot.lane.b32.xlu0 %v943, 96
    %v995 = vpop.permute.xlu0 %994
    %v997 = vsel %vm184, %v943, 0
    %v1000 = vsel %vm184, %v995, 0
    %1002 = vmatprep.subr.bf16.mxu0 0
    %1003 = vmatpush1.bf16.xpose.msra.mxu0 %v1000
    %1004 = vmatprep.subr.bf16.mxu0 0
    %1005 = vmatpush1.bf16.xpose.msra.mxu0 0
    %1006 = vmatprep.subr.bf16.mxu0 0
    %1007 = vmatpush1.bf16.xpose.msra.mxu0 0
    %1008 = vmatprep.subr.bf16.mxu0 0
    %1009 = vmatpush1.bf16.xpose.msra.mxu0 0
    %1010 = vmatprep.subr.bf16.mxu0 0
    %1011 = vmatpush1.bf16.xpose.msra.mxu0 0
    %1012 = vmatprep.subr.bf16.mxu0 0
    %1013 = vmatpush1.bf16.xpose.msra.mxu0 0
    %1014 = vmatprep.subr.bf16.mxu0 0
    %1015 = vmatpush1.bf16.xpose.msra.mxu0 0
    %1016 = vmatprep.subr.bf16.mxu0 0
    %1017 = vmatpush1.bf16.xpose.msra.mxu0 0
    %1018 = vmatprep.subr.bf16.mxu0 0
    %1019 = vmatpush1.bf16.xpose.msra.mxu0 0
    %1020 = vmatprep.subr.bf16.mxu0 0
    %1021 = vmatpush1.bf16.xpose.msra.mxu0 0
    %1022 = vmatprep.subr.bf16.mxu0 0
    %1023 = vmatpush1.bf16.xpose.msra.mxu0 0
    %1024 = vmatprep.subr.bf16.mxu0 0
    %1025 = vmatpush1.bf16.xpose.msra.mxu0 0
    %1026 = vmatprep.subr.bf16.mxu0 0
    %1027 = vmatpush1.bf16.xpose.msra.mxu0 0
    %1028 = vmatprep.subr.bf16.mxu0 0
    %1029 = vmatpush1.bf16.xpose.msra.mxu0 0
    %1030 = vmatprep.subr.bf16.mxu0 0
    %1031 = vmatpush1.bf16.xpose.msra.mxu0 0
    %1032 = vmatprep.subr.bf16.mxu0 0
    %1033 = vmatpush1.bf16.xpose.msra.mxu0 0
    %1034 = vmatprep.mubr.bf16.mxu0 0
    %1035 = vmatmul.mubr.bf16.gmra.mrb[0].mxu0 %v997
    %v1036 = vpop.f32.mrb[0].mxu0
    %v1037 = vadd.f32 0.0, %v1036
    %v1038 = vpop.f32.mrb[0].mxu0
    %v1039 = vpop.f32.mrb[0].mxu0
    %v1040 = vpop.f32.mrb[0].mxu0
    %1041 = vdwg.mxu0
    %v1042 = vsel %vm280, %v988, -inf
    %1043 = vmax.xlane.f32.xlu0 %v1042
    %v1044 = vpop.xlane.xlu0 %1043
    %v1045 = vsel %vm280, %v1037, -inf
    %1046 = vmax.xlane.f32.xlu0 %v1045
    %v1047 = vpop.xlane.xlu0 %1046
    %v1048 = vsub.f32 %v988, %v1044
    %v1049 = vsub.f32 %v1037, %v1047
    %v1050 = vmul.f32 %v1048, 1.442695
    %v1051 = vpow.pop %v1050
    %v1052 = vmul.f32 %v1049, 1.442695
    %v1053 = vpow.pop %v1052
    %v1054 = vsel %vm280, %v1051, 0.0
    %1055 = vadd.xlane.f32.xlu0 %v1054
    %v1056 = vpop.xlane.xlu0 %1055
    %v1057 = vsel %vm280, %v1053, 0.0
    %1058 = vadd.xlane.f32.xlu0 %v1057
    %v1059 = vpop.xlane.xlu0 %1058
    %v1060 = vrcp.pop %v1056
    %v1061 = vrcp.pop %v1059
    %v1062 = vmul.f32 %v1051, %v1060
    %v1063 = vmul.f32 %v1053, %v1061
    %v1064 = vpack.c.bf16 %v1062, %v1062
    %v1065 = vpack.c.bf16 %v1063, %v1063
    %1066 = vrot.lane.b32.xlu0 %v942, 112
    %v1067 = vpop.permute.xlu0 %1066
    %1068 = vrot.lane.b32.xlu0 %v942, 80
    %v1069 = vpop.permute.xlu0 %1068
    %v1071 = vsel %vm184, %v1067, 0
    %v1074 = vsel %vm184, %v1069, 0
    %1076 = vmatprep.subr.bf16.mxu0 0
    %1077 = vmatpush1.bf16.xpose.msra.mxu0 %v1074
    %1078 = vmatprep.subr.bf16.mxu0 0
    %1079 = vmatpush1.bf16.xpose.msra.mxu0 0
    %1080 = vmatprep.subr.bf16.mxu0 0
    %1081 = vmatpush1.bf16.xpose.msra.mxu0 0
    %1082 = vmatprep.subr.bf16.mxu0 0
    %1083 = vmatpush1.bf16.xpose.msra.mxu0 0
    %1084 = vmatprep.subr.bf16.mxu0 0
    %1085 = vmatpush1.bf16.xpose.msra.mxu0 0
    %1086 = vmatprep.subr.bf16.mxu0 0
    %1087 = vmatpush1.bf16.xpose.msra.mxu0 0
    %1088 = vmatprep.subr.bf16.mxu0 0
    %1089 = vmatpush1.bf16.xpose.msra.mxu0 0
    %1090 = vmatprep.subr.bf16.mxu0 0
    %1091 = vmatpush1.bf16.xpose.msra.mxu0 0
    %1092 = vmatprep.subr.bf16.mxu0 0
    %1093 = vmatpush1.bf16.xpose.msra.mxu0 0
    %1094 = vmatprep.subr.bf16.mxu0 0
    %1095 = vmatpush1.bf16.xpose.msra.mxu0 0
    %1096 = vmatprep.subr.bf16.mxu0 0
    %1097 = vmatpush1.bf16.xpose.msra.mxu0 0
    %1098 = vmatprep.subr.bf16.mxu0 0
    %1099 = vmatpush1.bf16.xpose.msra.mxu0 0
    %1100 = vmatprep.subr.bf16.mxu0 0
    %1101 = vmatpush1.bf16.xpose.msra.mxu0 0
    %1102 = vmatprep.subr.bf16.mxu0 0
    %1103 = vmatpush1.bf16.xpose.msra.mxu0 0
    %1104 = vmatprep.subr.bf16.mxu0 0
    %1105 = vmatpush1.bf16.xpose.msra.mxu0 0
    %1106 = vmatprep.subr.bf16.mxu0 0
    %1107 = vmatpush1.bf16.xpose.msra.mxu0 0
    %1108 = vmatprep.mubr.bf16.mxu0 0
    %1109 = vmatmul.mubr.bf16.gmra.mrb[0].mxu0 %v1071
    %v1110 = vpop.f32.mrb[0].mxu0
    %v1111 = vadd.f32 0.0, %v1110
    %v1112 = vpop.f32.mrb[0].mxu0
    %v1113 = vpop.f32.mrb[0].mxu0
    %v1114 = vpop.f32.mrb[0].mxu0
    %1115 = vdwg.mxu0
    %1116 = vrot.lane.b32.xlu0 %v943, 112
    %v1117 = vpop.permute.xlu0 %1116
    %1118 = vrot.lane.b32.xlu0 %v943, 80
    %v1119 = vpop.permute.xlu0 %1118
    %v1121 = vsel %vm184, %v1117, 0
    %v1124 = vsel %vm184, %v1119, 0
    %1126 = vmatprep.subr.bf16.mxu0 0
    %1127 = vmatpush1.bf16.xpose.msra.mxu0 %v1124
    %1128 = vmatprep.subr.bf16.mxu0 0
    %1129 = vmatpush1.bf16.xpose.msra.mxu0 0
    %1130 = vmatprep.subr.bf16.mxu0 0
    %1131 = vmatpush1.bf16.xpose.msra.mxu0 0
    %1132 = vmatprep.subr.bf16.mxu0 0
    %1133 = vmatpush1.bf16.xpose.msra.mxu0 0
    %1134 = vmatprep.subr.bf16.mxu0 0
    %1135 = vmatpush1.bf16.xpose.msra.mxu0 0
    %1136 = vmatprep.subr.bf16.mxu0 0
    %1137 = vmatpush1.bf16.xpose.msra.mxu0 0
    %1138 = vmatprep.subr.bf16.mxu0 0
    %1139 = vmatpush1.bf16.xpose.msra.mxu0 0
    %1140 = vmatprep.subr.bf16.mxu0 0
    %1141 = vmatpush1.bf16.xpose.msra.mxu0 0
    %1142 = vmatprep.subr.bf16.mxu0 0
    %1143 = vmatpush1.bf16.xpose.msra.mxu0 0
    %1144 = vmatprep.subr.bf16.mxu0 0
    %1145 = vmatpush1.bf16.xpose.msra.mxu0 0
    %1146 = vmatprep.subr.bf16.mxu0 0
    %1147 = vmatpush1.bf16.xpose.msra.mxu0 0
    %1148 = vmatprep.subr.bf16.mxu0 0
    %1149 = vmatpush1.bf16.xpose.msra.mxu0 0
    %1150 = vmatprep.subr.bf16.mxu0 0
    %1151 = vmatpush1.bf16.xpose.msra.mxu0 0
    %1152 = vmatprep.subr.bf16.mxu0 0
    %1153 = vmatpush1.bf16.xpose.msra.mxu0 0
    %1154 = vmatprep.subr.bf16.mxu0 0
    %1155 = vmatpush1.bf16.xpose.msra.mxu0 0
    %1156 = vmatprep.subr.bf16.mxu0 0
    %1157 = vmatpush1.bf16.xpose.msra.mxu0 0
    %1158 = vmatprep.mubr.bf16.mxu0 0
    %1159 = vmatmul.mubr.bf16.gmra.mrb[0].mxu0 %v1121
    %v1160 = vpop.f32.mrb[0].mxu0
    %v1161 = vadd.f32 0.0, %v1160
    %v1162 = vpop.f32.mrb[0].mxu0
    %v1163 = vpop.f32.mrb[0].mxu0
    %v1164 = vpop.f32.mrb[0].mxu0
    %1165 = vdwg.mxu0
    %v1166 = vsel %vm280, %v1111, -inf
    %1167 = vmax.xlane.f32.xlu0 %v1166
    %v1168 = vpop.xlane.xlu0 %1167
    %v1169 = vsel %vm280, %v1161, -inf
    %1170 = vmax.xlane.f32.xlu0 %v1169
    %v1171 = vpop.xlane.xlu0 %1170
    %v1172 = vsub.f32 %v1111, %v1168
    %v1173 = vsub.f32 %v1161, %v1171
    %v1174 = vmul.f32 %v1172, 1.442695
    %v1175 = vpow.pop %v1174
    %v1176 = vmul.f32 %v1173, 1.442695
    %v1177 = vpow.pop %v1176
    %v1178 = vsel %vm280, %v1175, 0.0
    %1179 = vadd.xlane.f32.xlu0 %v1178
    %v1180 = vpop.xlane.xlu0 %1179
    %v1181 = vsel %vm280, %v1177, 0.0
    %1182 = vadd.xlane.f32.xlu0 %v1181
    %v1183 = vpop.xlane.xlu0 %1182
    %v1184 = vrcp.pop %v1180
    %v1185 = vrcp.pop %v1183
    %v1186 = vmul.f32 %v1175, %v1184
    %v1187 = vmul.f32 %v1177, %v1185
    %v1188 = vpack.c.bf16 %v1186, %v1186
    %v1189 = vpack.c.bf16 %v1187, %v1187
    %1190 = vrot.lane.b32.xlu0 %v942, 32
    %v1191 = vpop.permute.xlu0 %1190
    %v1193 = vsel %vm280, %v1188, 0
    %v1196 = vsel %vm434, %v1191, 0
    %1198 = vmatprep.subr.bf16.mxu0 0
    %1199 = vmatpush1.bf16.msra.mxu0 %v1196
    %1200 = vmatprep.subr.bf16.mxu0 0
    %1201 = vmatpush1.bf16.msra.mxu0 0
    %1202 = vmatprep.subr.bf16.mxu0 0
    %1203 = vmatpush1.bf16.msra.mxu0 0
    %1204 = vmatprep.subr.bf16.mxu0 0
    %1205 = vmatpush1.bf16.msra.mxu0 0
    %1206 = vmatprep.subr.bf16.mxu0 0
    %1207 = vmatpush1.bf16.msra.mxu0 0
    %1208 = vmatprep.subr.bf16.mxu0 0
    %1209 = vmatpush1.bf16.msra.mxu0 0
    %1210 = vmatprep.subr.bf16.mxu0 0
    %1211 = vmatpush1.bf16.msra.mxu0 0
    %1212 = vmatprep.subr.bf16.mxu0 0
    %1213 = vmatpush1.bf16.msra.mxu0 0
    %1214 = vmatprep.subr.bf16.mxu0 0
    %1215 = vmatpush1.bf16.msra.mxu0 0
    %1216 = vmatprep.subr.bf16.mxu0 0
    %1217 = vmatpush1.bf16.msra.mxu0 0
    %1218 = vmatprep.subr.bf16.mxu0 0
    %1219 = vmatpush1.bf16.msra.mxu0 0
    %1220 = vmatprep.subr.bf16.mxu0 0
    %1221 = vmatpush1.bf16.msra.mxu0 0
    %1222 = vmatprep.subr.bf16.mxu0 0
    %1223 = vmatpush1.bf16.msra.mxu0 0
    %1224 = vmatprep.subr.bf16.mxu0 0
    %1225 = vmatpush1.bf16.msra.mxu0 0
    %1226 = vmatprep.subr.bf16.mxu0 0
    %1227 = vmatpush1.bf16.msra.mxu0 0
    %1228 = vmatprep.subr.bf16.mxu0 0
    %1229 = vmatpush1.bf16.msra.mxu0 0
    %1230 = vmatprep.mubr.bf16.mxu0 0
    %1231 = vmatmul.mubr.bf16.gmra.mrb[0].mxu0 %v1193
    %v1232 = vpop.f32.mrb[0].mxu0
    %v1233 = vadd.f32 0.0, %v1232
    %v1234 = vpop.f32.mrb[0].mxu0
    %v1235 = vpop.f32.mrb[0].mxu0
    %v1236 = vpop.f32.mrb[0].mxu0
    %1237 = vdwg.mxu0
    %1238 = vrot.lane.b32.xlu0 %v943, 32
    %v1239 = vpop.permute.xlu0 %1238
    %v1241 = vsel %vm280, %v1189, 0
    %v1244 = vsel %vm434, %v1239, 0
    %1246 = vmatprep.subr.bf16.mxu0 0
    %1247 = vmatpush1.bf16.msra.mxu0 %v1244
    %1248 = vmatprep.subr.bf16.mxu0 0
    %1249 = vmatpush1.bf16.msra.mxu0 0
    %1250 = vmatprep.subr.bf16.mxu0 0
    %1251 = vmatpush1.bf16.msra.mxu0 0
    %1252 = vmatprep.subr.bf16.mxu0 0
    %1253 = vmatpush1.bf16.msra.mxu0 0
    %1254 = vmatprep.subr.bf16.mxu0 0
    %1255 = vmatpush1.bf16.msra.mxu0 0
    %1256 = vmatprep.subr.bf16.mxu0 0
    %1257 = vmatpush1.bf16.msra.mxu0 0
    %1258 = vmatprep.subr.bf16.mxu0 0
    %1259 = vmatpush1.bf16.msra.mxu0 0
    %1260 = vmatprep.subr.bf16.mxu0 0
    %1261 = vmatpush1.bf16.msra.mxu0 0
    %1262 = vmatprep.subr.bf16.mxu0 0
    %1263 = vmatpush1.bf16.msra.mxu0 0
    %1264 = vmatprep.subr.bf16.mxu0 0
    %1265 = vmatpush1.bf16.msra.mxu0 0
    %1266 = vmatprep.subr.bf16.mxu0 0
    %1267 = vmatpush1.bf16.msra.mxu0 0
    %1268 = vmatprep.subr.bf16.mxu0 0
    %1269 = vmatpush1.bf16.msra.mxu0 0
    %1270 = vmatprep.subr.bf16.mxu0 0
    %1271 = vmatpush1.bf16.msra.mxu0 0
    %1272 = vmatprep.subr.bf16.mxu0 0
    %1273 = vmatpush1.bf16.msra.mxu0 0
    %1274 = vmatprep.subr.bf16.mxu0 0
    %1275 = vmatpush1.bf16.msra.mxu0 0
    %1276 = vmatprep.subr.bf16.mxu0 0
    %1277 = vmatpush1.bf16.msra.mxu0 0
    %1278 = vmatprep.mubr.bf16.mxu0 0
    %1279 = vmatmul.mubr.bf16.gmra.mrb[0].mxu0 %v1241
    %v1280 = vpop.f32.mrb[0].mxu0
    %v1281 = vadd.f32 0.0, %v1280
    %v1282 = vpop.f32.mrb[0].mxu0
    %v1283 = vpop.f32.mrb[0].mxu0
    %v1284 = vpop.f32.mrb[0].mxu0
    %1285 = vdwg.mxu0
    %1286 = vrot.lane.b32.xlu0 %v942, 64
    %v1287 = vpop.permute.xlu0 %1286
    %v1289 = vsel %vm280, %v1064, 0
    %v1292 = vsel %vm434, %v1287, 0
    %1294 = vmatprep.subr.bf16.mxu0 0
    %1295 = vmatpush1.bf16.msra.mxu0 %v1292
    %1296 = vmatprep.subr.bf16.mxu0 0
    %1297 = vmatpush1.bf16.msra.mxu0 0
    %1298 = vmatprep.subr.bf16.mxu0 0
    %1299 = vmatpush1.bf16.msra.mxu0 0
    %1300 = vmatprep.subr.bf16.mxu0 0
    %1301 = vmatpush1.bf16.msra.mxu0 0
    %1302 = vmatprep.subr.bf16.mxu0 0
    %1303 = vmatpush1.bf16.msra.mxu0 0
    %1304 = vmatprep.subr.bf16.mxu0 0
    %1305 = vmatpush1.bf16.msra.mxu0 0
    %1306 = vmatprep.subr.bf16.mxu0 0
    %1307 = vmatpush1.bf16.msra.mxu0 0
    %1308 = vmatprep.subr.bf16.mxu0 0
    %1309 = vmatpush1.bf16.msra.mxu0 0
    %1310 = vmatprep.subr.bf16.mxu0 0
    %1311 = vmatpush1.bf16.msra.mxu0 0
    %1312 = vmatprep.subr.bf16.mxu0 0
    %1313 = vmatpush1.bf16.msra.mxu0 0
    %1314 = vmatprep.subr.bf16.mxu0 0
    %1315 = vmatpush1.bf16.msra.mxu0 0
    %1316 = vmatprep.subr.bf16.mxu0 0
    %1317 = vmatpush1.bf16.msra.mxu0 0
    %1318 = vmatprep.subr.bf16.mxu0 0
    %1319 = vmatpush1.bf16.msra.mxu0 0
    %1320 = vmatprep.subr.bf16.mxu0 0
    %1321 = vmatpush1.bf16.msra.mxu0 0
    %1322 = vmatprep.subr.bf16.mxu0 0
    %1323 = vmatpush1.bf16.msra.mxu0 0
    %1324 = vmatprep.subr.bf16.mxu0 0
    %1325 = vmatpush1.bf16.msra.mxu0 0
    %1326 = vmatprep.mubr.bf16.mxu0 0
    %1327 = vmatmul.mubr.bf16.gmra.mrb[0].mxu0 %v1289
    %v1328 = vpop.f32.mrb[0].mxu0
    %v1329 = vadd.f32 %v1233, %v1328
    %v1330 = vpop.f32.mrb[0].mxu0
    %v1331 = vpop.f32.mrb[0].mxu0
    %v1332 = vpop.f32.mrb[0].mxu0
    %1333 = vdwg.mxu0
    %1334 = vrot.lane.b32.xlu0 %v943, 64
    %v1335 = vpop.permute.xlu0 %1334
    %v1337 = vsel %vm280, %v1065, 0
    %v1340 = vsel %vm434, %v1335, 0
    %1342 = vmatprep.subr.bf16.mxu0 0
    %1343 = vmatpush1.bf16.msra.mxu0 %v1340
    %1344 = vmatprep.subr.bf16.mxu0 0
    %1345 = vmatpush1.bf16.msra.mxu0 0
    %1346 = vmatprep.subr.bf16.mxu0 0
    %1347 = vmatpush1.bf16.msra.mxu0 0
    %1348 = vmatprep.subr.bf16.mxu0 0
    %1349 = vmatpush1.bf16.msra.mxu0 0
    %1350 = vmatprep.subr.bf16.mxu0 0
    %1351 = vmatpush1.bf16.msra.mxu0 0
    %1352 = vmatprep.subr.bf16.mxu0 0
    %1353 = vmatpush1.bf16.msra.mxu0 0
    %1354 = vmatprep.subr.bf16.mxu0 0
    %1355 = vmatpush1.bf16.msra.mxu0 0
    %1356 = vmatprep.subr.bf16.mxu0 0
    %1357 = vmatpush1.bf16.msra.mxu0 0
    %1358 = vmatprep.subr.bf16.mxu0 0
    %1359 = vmatpush1.bf16.msra.mxu0 0
    %1360 = vmatprep.subr.bf16.mxu0 0
    %1361 = vmatpush1.bf16.msra.mxu0 0
    %1362 = vmatprep.subr.bf16.mxu0 0
    %1363 = vmatpush1.bf16.msra.mxu0 0
    %1364 = vmatprep.subr.bf16.mxu0 0
    %1365 = vmatpush1.bf16.msra.mxu0 0
    %1366 = vmatprep.subr.bf16.mxu0 0
    %1367 = vmatpush1.bf16.msra.mxu0 0
    %1368 = vmatprep.subr.bf16.mxu0 0
    %1369 = vmatpush1.bf16.msra.mxu0 0
    %1370 = vmatprep.subr.bf16.mxu0 0
    %1371 = vmatpush1.bf16.msra.mxu0 0
    %1372 = vmatprep.subr.bf16.mxu0 0
    %1373 = vmatpush1.bf16.msra.mxu0 0
    %1374 = vmatprep.mubr.bf16.mxu0 0
    %1375 = vmatmul.mubr.bf16.gmra.mrb[0].mxu0 %v1337
    %v1376 = vpop.f32.mrb[0].mxu0
    %v1377 = vadd.f32 %v1281, %v1376
    %v1378 = vpop.f32.mrb[0].mxu0
    %v1379 = vpop.f32.mrb[0].mxu0
    %v1380 = vpop.f32.mrb[0].mxu0
    %1381 = vdwg.mxu0
    %v1382 = vadd.f32 %v821, %v1329
    %v1383 = vadd.f32 %v822, %v1377
    %v1384 = vlaneseq
    %v1385 = vshrl.u32 %v1384, 7
    %v1386 = vsub.s32 0, %v1385
    %v1387 = vrot.slane %v825, %v1386
    %v1388 = vadd.f32 %v1382, %v1387
    %v1389 = vadd.f32 %v1383, %v1387
    %v1390 = vsel %vm82, %v1388, 0.0
    %1391 = vadd.xlane.f32.xlu0 %v1390
    %v1392 = vpop.xlane.xlu0 %1391
    %v1393 = vsel %vm82, %v1389, 0.0
    %1394 = vadd.xlane.f32.xlu0 %v1393
    %v1395 = vpop.xlane.xlu0 %1394
    %v1396 = vmul.f32 %v1392, %v89
    %v1397 = vmul.f32 %v1395, %v89
    %v1398 = vsub.f32 %v1388, %v1396
    %v1399 = vsub.f32 %v1389, %v1397
    %v1400 = vmul.f32 %v1398, %v1398
    %v1401 = vmul.f32 %v1399, %v1399
    %v1402 = vsel %vm82, %v1400, 0.0
    %1403 = vadd.xlane.f32.xlu0 %v1402
    %v1404 = vpop.xlane.xlu0 %1403
    %v1405 = vsel %vm82, %v1401, 0.0
    %1406 = vadd.xlane.f32.xlu0 %v1405
    %v1407 = vpop.xlane.xlu0 %1406
    %v1408 = vmul.f32 %v1404, %v89
    %v1409 = vmul.f32 %v1407, %v89
    %v1410 = vadd.f32 %v1408, 1e-05
    %v1411 = vadd.f32 %v1409, 1e-05
    %v1412 = vrsqrt.pop %v1410
    %v1413 = vrsqrt.pop %v1411
    %v1414 = vmul.f32 %v1398, %v1412
    %v1415 = vmul.f32 %v1399, %v1413
    %v1416 = vlaneseq
    %v1417 = vshrl.u32 %v1416, 7
    %v1418 = vsub.s32 0, %v1417
    %v1419 = vrot.slane %v826, %v1418
    %v1420 = vmul.f32 %v1414, %v1419
    %v1421 = vmul.f32 %v1415, %v1419
    %v1422 = vlaneseq
    %v1423 = vshrl.u32 %v1422, 7
    %v1424 = vsub.s32 0, %v1423
    %v1425 = vrot.slane %v827, %v1424
    %v1426 = vadd.f32 %v1420, %v1425
    %v1427 = vadd.f32 %v1421, %v1425
    %v1428 = vpack.c.bf16 %v1427, %v1426
    %v1429 = vlaneseq
    %v1430 = vshrl.u32 %v1429, 7
    %v1431 = vsub.s32 0, %v1430
    %v1432 = vrot.slane %v828, %v1431
    %v1437 = vunpack.c.l.b16 %v835
    %v1438 = vunpack.c.l.b16 %v836
    %v1439 = vunpack.c.l.b16 %v837
    %v1440 = vunpack.c.l.b16 %v838
    %v1441 = vpack.c.b16 %v1438, %v1437
    %v1442 = vpack.c.b16 %v1440, %v1439
    %v1446 = vsel %vm82, %v1428, 0
    %1448 = vmatprep.subr.bf16.mxu0 0
    %1449 = vmatpush1.bf16.msra.mxu0 %v1441
    %1450 = vmatprep.subr.bf16.mxu0 0
    %1451 = vmatpush1.bf16.msra.mxu0 %v1442
    %1452 = vmatprep.subr.bf16.mxu0 0
    %1453 = vmatpush1.bf16.msra.mxu0 0
    %1454 = vmatprep.subr.bf16.mxu0 0
    %1455 = vmatpush1.bf16.msra.mxu0 0
    %1456 = vmatprep.subr.bf16.mxu0 0
    %1457 = vmatpush1.bf16.msra.mxu0 0
    %1458 = vmatprep.subr.bf16.mxu0 0
    %1459 = vmatpush1.bf16.msra.mxu0 0
    %1460 = vmatprep.subr.bf16.mxu0 0
    %1461 = vmatpush1.bf16.msra.mxu0 0
    %1462 = vmatprep.subr.bf16.mxu0 0
    %1463 = vmatpush1.bf16.msra.mxu0 0
    %1464 = vmatprep.subr.bf16.mxu0 0
    %1465 = vmatpush1.bf16.msra.mxu0 0
    %1466 = vmatprep.subr.bf16.mxu0 0
    %1467 = vmatpush1.bf16.msra.mxu0 0
    %1468 = vmatprep.subr.bf16.mxu0 0
    %1469 = vmatpush1.bf16.msra.mxu0 0
    %1470 = vmatprep.subr.bf16.mxu0 0
    %1471 = vmatpush1.bf16.msra.mxu0 0
    %1472 = vmatprep.subr.bf16.mxu0 0
    %1473 = vmatpush1.bf16.msra.mxu0 0
    %1474 = vmatprep.subr.bf16.mxu0 0
    %1475 = vmatpush1.bf16.msra.mxu0 0
    %1476 = vmatprep.subr.bf16.mxu0 0
    %1477 = vmatpush1.bf16.msra.mxu0 0
    %1478 = vmatprep.subr.bf16.mxu0 0
    %1479 = vmatpush1.bf16.msra.mxu0 0
    %1480 = vmatprep.mubr.bf16.mxu0 0
    %1481 = vmatmul.mubr.bf16.gmra.mrb[0].mxu0 %v1446
    %v1482 = vpop.f32.mrb[0].mxu0
    %v1483 = vadd.f32 %v1432, %v1482
    %v1484 = vpop.f32.mrb[0].mxu0
    %v1485 = vpop.f32.mrb[0].mxu0
    %v1486 = vadd.f32 %v1432, %v1485
    %v1487 = vpop.f32.mrb[0].mxu0
    %1488 = vdwg.mxu0
    %v1489 = vmul.f32 %v1483, %v1483
    %v1490 = vmul.f32 %v1486, %v1486
    %v1491 = vmul.f32 %v1483, %v1489
    %v1492 = vmul.f32 %v1486, %v1490
    %v1493 = vmul.f32 %v1491, 0.044715
    %v1494 = vmul.f32 %v1492, 0.044715
    %v1495 = vadd.f32 %v1483, %v1493
    %v1496 = vadd.f32 %v1486, %v1494
    %v1497 = vmul.f32 %v1495, 0.7978846
    %v1498 = vmul.f32 %v1496, 0.7978846
    %v1499 = vtanh.pop %v1497
    %v1500 = vtanh.pop %v1498
    %v1501 = vadd.f32 %v1499, 1.0
    %v1502 = vadd.f32 %v1500, 1.0
    %v1503 = vmul.f32 %v1501, 0.5
    %v1504 = vmul.f32 %v1502, 0.5
    %v1505 = vmul.f32 %v1483, %v1503
    %v1506 = vmul.f32 %v1486, %v1504
    %v1507 = vpack.c.bf16 %v1506, %v1505
    %v1508 = vlaneseq
    %v1509 = vshrl.u32 %v1508, 7
    %v1510 = vsub.s32 0, %v1509
    %v1511 = vrot.slane %v829, %v1510
    %v1520 = vunpack.c.l.b16 %v839
    %v1521 = vunpack.c.l.b16 %v840
    %v1522 = vunpack.c.l.b16 %v841
    %v1523 = vunpack.c.l.b16 %v842
    %v1524 = vunpack.c.l.b16 %v843
    %v1525 = vunpack.c.l.b16 %v844
    %v1526 = vunpack.c.l.b16 %v845
    %v1527 = vunpack.c.l.b16 %v846
    %v1528 = vpack.c.b16 %v1521, %v1520
    %v1529 = vpack.c.b16 %v1523, %v1522
    %v1530 = vpack.c.b16 %v1525, %v1524
    %v1531 = vpack.c.b16 %v1527, %v1526
    %v1537 = vsel %vm776, %v1507, 0
    %1539 = vmatprep.subr.bf16.mxu0 0
    %1540 = vmatpush1.bf16.msra.mxu0 %v1528
    %1541 = vmatprep.subr.bf16.mxu0 0
    %1542 = vmatpush1.bf16.msra.mxu0 %v1529
    %1543 = vmatprep.subr.bf16.mxu0 0
    %1544 = vmatpush1.bf16.msra.mxu0 %v1530
    %1545 = vmatprep.subr.bf16.mxu0 0
    %1546 = vmatpush1.bf16.msra.mxu0 %v1531
    %1547 = vmatprep.subr.bf16.mxu0 0
    %1548 = vmatpush1.bf16.msra.mxu0 0
    %1549 = vmatprep.subr.bf16.mxu0 0
    %1550 = vmatpush1.bf16.msra.mxu0 0
    %1551 = vmatprep.subr.bf16.mxu0 0
    %1552 = vmatpush1.bf16.msra.mxu0 0
    %1553 = vmatprep.subr.bf16.mxu0 0
    %1554 = vmatpush1.bf16.msra.mxu0 0
    %1555 = vmatprep.subr.bf16.mxu0 0
    %1556 = vmatpush1.bf16.msra.mxu0 0
    %1557 = vmatprep.subr.bf16.mxu0 0
    %1558 = vmatpush1.bf16.msra.mxu0 0
    %1559 = vmatprep.subr.bf16.mxu0 0
    %1560 = vmatpush1.bf16.msra.mxu0 0
    %1561 = vmatprep.subr.bf16.mxu0 0
    %1562 = vmatpush1.bf16.msra.mxu0 0
    %1563 = vmatprep.subr.bf16.mxu0 0
    %1564 = vmatpush1.bf16.msra.mxu0 0
    %1565 = vmatprep.subr.bf16.mxu0 0
    %1566 = vmatpush1.bf16.msra.mxu0 0
    %1567 = vmatprep.subr.bf16.mxu0 0
    %1568 = vmatpush1.bf16.msra.mxu0 0
    %1569 = vmatprep.subr.bf16.mxu0 0
    %1570 = vmatpush1.bf16.msra.mxu0 0
    %1571 = vmatprep.mubr.bf16.mxu0 0
    %1572 = vmatmul.mubr.bf16.gmra.mrb[0].mxu0 %v1537
    %v1573 = vpop.f32.mrb[0].mxu0
    %v1574 = vadd.f32 %v1511, %v1573
    %v1575 = vpop.f32.mrb[0].mxu0
    %v1576 = vpop.f32.mrb[0].mxu0
    %v1577 = vadd.f32 %v1511, %v1576
    %v1578 = vpop.f32.mrb[0].mxu0
    %1579 = vdwg.mxu0
    %v1580 = vadd.f32 %v1388, %v1574
    %v1581 = vadd.f32 %v1389, %v1577
    %v1582 = vld [vmem:[#allocation7 + $0x10] sm:$0x1]
    %v1583 = vld [vmem:[#allocation7 + $0x11] sm:$0x1]
    %v1584 = vsel %vm82, %v1580, 0.0
    %1585 = vadd.xlane.f32.xlu0 %v1584
    %v1586 = vpop.xlane.xlu0 %1585
    %v1587 = vsel %vm82, %v1581, 0.0
    %1588 = vadd.xlane.f32.xlu0 %v1587
    %v1589 = vpop.xlane.xlu0 %1588
    %v1590 = vmul.f32 %v1586, %v89
    %v1591 = vmul.f32 %v1589, %v89
    %v1592 = vsub.f32 %v1580, %v1590
    %v1593 = vsub.f32 %v1581, %v1591
    %v1594 = vmul.f32 %v1592, %v1592
    %v1595 = vmul.f32 %v1593, %v1593
    %v1596 = vsel %vm82, %v1594, 0.0
    %1597 = vadd.xlane.f32.xlu0 %v1596
    %v1598 = vpop.xlane.xlu0 %1597
    %v1599 = vsel %vm82, %v1595, 0.0
    %1600 = vadd.xlane.f32.xlu0 %v1599
    %v1601 = vpop.xlane.xlu0 %1600
    %v1602 = vmul.f32 %v1598, %v89
    %v1603 = vmul.f32 %v1601, %v89
    %v1604 = vadd.f32 %v1602, 1e-05
    %v1605 = vadd.f32 %v1603, 1e-05
    %v1606 = vrsqrt.pop %v1604
    %v1607 = vrsqrt.pop %v1605
    %v1608 = vmul.f32 %v1592, %v1606
    %v1609 = vmul.f32 %v1593, %v1607
    %v1610 = vlaneseq
    %v1611 = vshrl.u32 %v1610, 7
    %v1612 = vsub.s32 0, %v1611
    %v1613 = vrot.slane %v1582, %v1612
    %v1614 = vmul.f32 %v1608, %v1613
    %v1615 = vmul.f32 %v1609, %v1613
    %v1616 = vlaneseq
    %v1617 = vshrl.u32 %v1616, 7
    %v1618 = vsub.s32 0, %v1617
    %v1619 = vrot.slane %v1583, %v1618
    %v1620 = vadd.f32 %v1614, %v1619
    %v1621 = vadd.f32 %v1615, %v1619
    %1622 = vst.msk [vmem:[#allocation8] sm:$0xff] %vm82, %v1620
    %1623 = vst.msk [vmem:[#allocation8 + $0x8] sm:$0xff] %vm82, %v1621
    // Predicated region
    $region26: #{tpu_custom_call.1} parent=1 // pred_check
      _
    $region27: #{tpu_custom_call.1} parent=1 // pred_check_branch
      %1625 = sbr.rel (0) target = $region29
    $region28: #{tpu_custom_call.1} parent=1 // pred_region
      %s1627 = ssub.s32 256, 256
      %1628 = vsyncadd [#allocation4], %s1627
      %s1629 = sshll.u32 [#allocation8], 4
      %s1630 = int_to_ptr.vmem [resolvable:$true] %s1629
      %1635 = dma.vmem_to_hbm [thread:$0]  %s1630, 256, %s3, [#allocation4], 128, 128, 8
    $region29: #{tpu_custom_call.1} parent=1 // pred_fallthru
      _
    // Predicated region
    $region30: #{tpu_custom_call.1} parent=1 // pred_check
      _
    $region31: #{tpu_custom_call.1} parent=1 // pred_check_branch
      %1637 = sbr.rel (0) target = $region33
    $region32: #{tpu_custom_call.1} parent=1 // pred_region
      %1638 = dma.done [#allocation4], 256
    $region33: #{tpu_custom_call.1} parent=1 // pred_fallthru
      _
    %1639 = vsyncpa [#allocation3], 1
    %1640 = vsyncpa [#allocation6], 1
    %1641 = vsyncpa [#allocation4], 1

</llo_original>
